<compile_context>
chip_gen: v7x
topology: tpu7x:2x2x1
jax: 0.10.0
libtpu: 0.0.40
codegen_flags: <defaults>
</compile_context>

<pallas_src>
import math
import functools

import jax
import jax.numpy as jnp
from jax.experimental import pallas as pl
from jax.experimental.pallas import tpu as pltpu


def _attention_kernel(x_ref, wq_ref, bq_ref, wkv_ref, bkv_ref, w2_ref, b2_ref,
                      o_ref, k_scr, v_scr, q_scr, *, n_heads, d_kv, tq):
    """One grid step == (batch element b, query tile q).

    x_ref   : (1, S, D)      full sequence of batch b (bf16), resident across q
    wq_ref  : (D, H*dk)      Q projection weight, scale pre-folded (bf16)
    bq_ref  : (1, H*dk)      Q projection bias, scale pre-folded (f32)
    wkv_ref : (D, 2*H*dk)    K|V projection weight (bf16)
    bkv_ref : (1, 2*H*dk)    K|V projection bias (f32)
    w2_ref  : (H*dk, D)      output projection weight (bf16)
    b2_ref  : (1, D)         output projection bias (f32)
    o_ref   : (1, tq, D)     output tile
    k_scr   : (H, S, dk)     bf16 scratch, persists across query tiles
    v_scr   : (H, S, dk)     bf16 scratch, persists across query tiles
    q_scr   : (H, tq, dk)    bf16 scratch for the current query tile
    """
    q_idx = pl.program_id(1)
    hdk = n_heads * d_kv

    # ---- K / V projection for the full sequence, once per batch element ----
    @pl.when(q_idx == 0)
    def _():
        x_full = x_ref[0]                                        # (S, D) bf16
        kv = jnp.dot(x_full, wkv_ref[...],
                     preferred_element_type=jnp.float32)         # (S, 2*H*dk) f32
        kv = kv + bkv_ref[0]
        for h in range(n_heads):                                 # once per batch elem
            k_scr[h] = kv[:, h * d_kv:(h + 1) * d_kv].astype(k_scr.dtype)
            v_scr[h] = kv[:, hdk + h * d_kv:hdk + (h + 1) * d_kv].astype(v_scr.dtype)

    # ---- Q projection for this query tile (scale already folded in) ----
    qstart = pl.multiple_of(q_idx * tq, tq)
    x_q = x_ref[0, pl.ds(qstart, tq), :]                         # (tq, D) bf16
    qp = jnp.dot(x_q, wq_ref[...],
                 preferred_element_type=jnp.float32)             # (tq, H*dk) f32
    qp = qp + bq_ref[0]
    for h in range(n_heads):
        q_scr[h] = qp[:, h * d_kv:(h + 1) * d_kv].astype(q_scr.dtype)

    # ---- all heads at once: scores, softmax (f32), context ----
    q = q_scr[...]                                               # (H, tq, dk) bf16
    k = k_scr[...]                                               # (H, S, dk) bf16
    v = v_scr[...]                                               # (H, S, dk) bf16

    s = jnp.einsum('hqd,hkd->hqk', q, k,
                   preferred_element_type=jnp.float32)           # (H, tq, S) f32
    s = s - jnp.max(s, axis=-1, keepdims=True)
    p = jnp.exp(s)
    p = p * pl.reciprocal(jnp.sum(p, axis=-1, keepdims=True), approx=True)

    ctx = jnp.einsum('hqk,hkd->hqd', p.astype(v.dtype), v,
                     preferred_element_type=jnp.float32)         # (H, tq, dk) f32

    # merge heads -> (tq, H*dk); equals torch transpose(1,2)+reshape
    ctx_flat = jnp.concatenate([ctx[h] for h in range(n_heads)], axis=-1)

    # dense2: one lane-dense K=H*dk matmul, full-D unmasked store
    out = jnp.dot(ctx_flat.astype(jnp.bfloat16), w2_ref[...],
                  preferred_element_type=jnp.float32)            # (tq, D) f32
    out = out + b2_ref[0]
    o_ref[0] = out.astype(o_ref.dtype)


def _pick_query_tile(S, q_block):
    for t in (q_block, 256, 128, 64, 32, 16, 8):
        if t <= S and S % t == 0:
            return t
    return S  # fall back to a single full-sequence tile


def self_attention_for_moe(x, w1, b1, w2, b2, *, n_heads, d_kv, q_block=256):
    """x: (B, S, d_model). Weights in JAX convention: dense(x) = x @ W + b."""
    B, S, D = x.shape
    hdk = n_heads * d_kv
    scale = 1.0 / math.sqrt(d_kv)

    # Wrapper-side weight prep: split dense1 into Q / KV parts, fold the
    # attention scale into the Q projection, cast matmul operands to bf16.
    w1f = w1.astype(jnp.float32)
    b1f = b1.astype(jnp.float32)
    wq = (w1f[:, :hdk] * scale).astype(jnp.bfloat16)            # (D, H*dk)
    wkv = w1f[:, hdk:].astype(jnp.bfloat16)                     # (D, 2*H*dk)
    bq = (b1f[:hdk] * scale).reshape(1, hdk)                    # f32
    bkv = b1f[hdk:].reshape(1, 2 * hdk)                         # f32
    w2_bf = w2.astype(jnp.bfloat16)                             # (H*dk, D)
    b2_2d = b2.reshape(1, D).astype(jnp.float32)
    x_bf = x.astype(jnp.bfloat16)

    tq = _pick_query_tile(S, q_block)
    nq = S // tq

    kernel = functools.partial(_attention_kernel,
                               n_heads=n_heads, d_kv=d_kv, tq=tq)

    return pl.pallas_call(
        kernel,
        out_shape=jax.ShapeDtypeStruct((B, S, D), x.dtype),
        grid_spec=pltpu.PrefetchScalarGridSpec(
            num_scalar_prefetch=0,
            grid=(B, nq),
            in_specs=[
                # full sequence per batch element; constant across the q axis
                pl.BlockSpec((1, S, D), lambda b, q: (b, 0, 0)),
                # weights / biases: constant index_map -> stay resident
                pl.BlockSpec((D, hdk), lambda b, q: (0, 0)),
                pl.BlockSpec((1, hdk), lambda b, q: (0, 0)),
                pl.BlockSpec((D, 2 * hdk), lambda b, q: (0, 0)),
                pl.BlockSpec((1, 2 * hdk), lambda b, q: (0, 0)),
                pl.BlockSpec((hdk, D), lambda b, q: (0, 0)),
                pl.BlockSpec((1, D), lambda b, q: (0, 0)),
            ],
            out_specs=pl.BlockSpec((1, tq, D), lambda b, q: (b, q, 0)),
            scratch_shapes=[
                pltpu.VMEM((n_heads, S, d_kv), jnp.bfloat16),   # K (per batch elem)
                pltpu.VMEM((n_heads, S, d_kv), jnp.bfloat16),   # V (per batch elem)
                pltpu.VMEM((n_heads, tq, d_kv), jnp.bfloat16),  # Q (per query tile)
            ],
        ),
        compiler_params=pltpu.CompilerParams(
            dimension_semantics=("parallel", "arbitrary"),
            vmem_limit_bytes=64 * 1024 * 1024,
        ),
    )(x_bf, wq, bq, wkv, bkv, w2_bf, b2_2d)


def _reference(x, w1, b1, w2, b2, *, n_heads, d_kv):
    """Pure-JAX f32 reference mirroring the torch forward exactly."""
    B, S, D = x.shape
    scale = 1.0 / math.sqrt(d_kv)
    qkv = x @ w1 + b1                                           # (B, S, 3*H*dk)
    qkv = qkv.reshape(B, S, 3, n_heads, d_kv)
    qkv = jnp.transpose(qkv, (2, 0, 3, 1, 4))                   # (3, B, H, S, dk)
    q, k, v = qkv[0], qkv[1], qkv[2]
    s = jnp.einsum('bhqd,bhkd->bhqk', q, k) * scale
    p = jax.nn.softmax(s, axis=-1)
    o = jnp.einsum('bhqk,bhkd->bhqd', p, v)                     # (B, H, S, dk)
    o = jnp.transpose(o, (0, 2, 1, 3)).reshape(B, S, n_heads * d_kv)
    return o @ w2 + b2


if __name__ == "__main__":
    # Small shapes consistent with the module's forward: (B, S, d_model)
    B, S = 2, 8
    d_model, n_heads, d_kv = 32, 4, 8

    key = jax.random.PRNGKey(0)
    kx, kw1, kb1, kw2, kb2 = jax.random.split(key, 5)

    x = jax.random.normal(kx, (B, S, d_model), dtype=jnp.float32)
    # dense1: d_model -> 3*n_heads*d_kv (with bias)
    w1 = jax.random.normal(kw1, (d_model, 3 * n_heads * d_kv),
                           dtype=jnp.float32) * (1.0 / math.sqrt(d_model))
    b1 = jax.random.normal(kb1, (3 * n_heads * d_kv,), dtype=jnp.float32) * 0.01
    # dense2: n_heads*d_kv -> d_model (with bias)
    w2 = jax.random.normal(kw2, (n_heads * d_kv, d_model),
                           dtype=jnp.float32) * (1.0 / math.sqrt(n_heads * d_kv))
    b2 = jax.random.normal(kb2, (d_model,), dtype=jnp.float32) * 0.01

    out = self_attention_for_moe(x, w1, b1, w2, b2,
                                 n_heads=n_heads, d_kv=d_kv)
    out = jax.block_until_ready(out)

    ref = _reference(x, w1, b1, w2, b2, n_heads=n_heads, d_kv=d_kv)
    assert out.shape == (B, S, d_model)
    # bf16 matmul operands (f32 accumulation) + approx reciprocal -> loosened
    # tolerance vs the pure-f32 reference.
    assert jnp.allclose(out, ref, atol=5e-2, rtol=5e-2), "mismatch vs reference"

    print("KERNEL_OK")
</pallas_src>

<mosaic_0001>
module attributes {stable_mosaic.version = 11 : i64} {
  func.func @_attention_kernel(%arg0: i32, %arg1: i32, %arg2: memref<1x8x32xbf16, #tpu.memory_space<vmem>>, %arg3: memref<32x32xbf16, #tpu.memory_space<vmem>>, %arg4: memref<1x32xf32, #tpu.memory_space<vmem>>, %arg5: memref<32x64xbf16, #tpu.memory_space<vmem>>, %arg6: memref<1x64xf32, #tpu.memory_space<vmem>>, %arg7: memref<32x32xbf16, #tpu.memory_space<vmem>>, %arg8: memref<1x32xf32, #tpu.memory_space<vmem>>, %arg9: memref<1x8x32xf32, #tpu.memory_space<vmem>>, %arg10: memref<4x8x8xbf16, #tpu.memory_space<vmem>>, %arg11: memref<4x8x8xbf16, #tpu.memory_space<vmem>>, %arg12: memref<4x8x8xbf16, #tpu.memory_space<vmem>>) attributes {dimension_semantics = [#tpu.dimension_semantics<parallel>, #tpu.dimension_semantics<arbitrary>], iteration_bounds = array<i64: 2, 1>, scalar_prefetch = 0 : i64, scratch_operands = 3 : i64, tpu.core_type = #tpu.core_type<tc>, window_params = [{transform_indices = @transform_0, window_bounds = array<i64: 1, 8, 32>}, {pipeline_mode = #tpu.pipeline_mode<synchronous>, transform_indices = @transform_1, window_bounds = array<i64: 32, 32>}, {pipeline_mode = #tpu.pipeline_mode<synchronous>, transform_indices = @transform_2, window_bounds = array<i64: 1, 32>}, {pipeline_mode = #tpu.pipeline_mode<synchronous>, transform_indices = @transform_3, window_bounds = array<i64: 32, 64>}, {pipeline_mode = #tpu.pipeline_mode<synchronous>, transform_indices = @transform_4, window_bounds = array<i64: 1, 64>}, {pipeline_mode = #tpu.pipeline_mode<synchronous>, transform_indices = @transform_5, window_bounds = array<i64: 32, 32>}, {pipeline_mode = #tpu.pipeline_mode<synchronous>, transform_indices = @transform_6, window_bounds = array<i64: 1, 32>}, {transform_indices = @transform_7, window_bounds = array<i64: 1, 8, 32>}]} {
    %c0_i32 = arith.constant 0 : i32
    %0 = arith.cmpi eq, %arg1, %c0_i32 : i32
    %1 = arith.extui %0 : i1 to i32
    %c0_i32_0 = arith.constant 0 : i32
    %2 = arith.cmpi ne, %1, %c0_i32_0 : i32
    scf.if %2 {
      %c0_36 = arith.constant 0 : index
      %c0_37 = arith.constant 0 : index
      %c0_38 = arith.constant 0 : index
      %71 = vector.load %arg2[%c0_36, %c0_37, %c0_38] : memref<1x8x32xbf16, #tpu.memory_space<vmem>>, vector<1x8x32xbf16>
      %72 = vector.shape_cast %71 : vector<1x8x32xbf16> to vector<8x32xbf16>
      %c0_39 = arith.constant 0 : index
      %c0_40 = arith.constant 0 : index
      %73 = vector.load %arg5[%c0_39, %c0_40] : memref<32x64xbf16, #tpu.memory_space<vmem>>, vector<32x64xbf16>
      %cst_41 = arith.constant dense<0.000000e+00> : vector<8x64xf32>
      %74 = tpu.matmul %72, %73, %cst_41 {dimension_numbers = #tpu.dot_dimension_numbers<[1], [0], [0], [1], [0, 0, 1, 1], [], []>} : vector<8x32xbf16>, vector<32x64xbf16>, vector<8x64xf32> -> vector<8x64xf32>
      %c0_42 = arith.constant 0 : index
      %c0_43 = arith.constant 0 : index
      %75 = vector.load %arg6[%c0_42, %c0_43] : memref<1x64xf32, #tpu.memory_space<vmem>>, vector<1x64xf32>
      %76 = vector.shape_cast %75 : vector<1x64xf32> to vector<64xf32>
      %77 = vector.shape_cast %76 : vector<64xf32> to vector<1x64xf32>
      %78 = vector.broadcast %77 : vector<1x64xf32> to vector<8x64xf32>
      %79 = arith.addf %74, %78 : vector<8x64xf32>
      %80 = vector.extract_strided_slice %79 {offsets = [0, 0], sizes = [8, 8], strides = [1, 1]} : vector<8x64xf32> to vector<8x8xf32>
      %81 = arith.truncf %80 : vector<8x8xf32> to vector<8x8xbf16>
      %c0_44 = arith.constant 0 : index
      %c0_45 = arith.constant 0 : index
      %c0_46 = arith.constant 0 : index
      %82 = vector.load %arg10[%c0_44, %c0_45, %c0_46] : memref<4x8x8xbf16, #tpu.memory_space<vmem>>, vector<1x8x8xbf16>
      %83 = vector.shape_cast %82 : vector<1x8x8xbf16> to vector<8x8xbf16>
      %84 = vector.shape_cast %81 : vector<8x8xbf16> to vector<1x8x8xbf16>
      tpu.vector_store %arg10[%c0_44, %c0_45, %c0_46], %84 {strides = array<i32>} : memref<4x8x8xbf16, #tpu.memory_space<vmem>>, vector<1x8x8xbf16>,
      %85 = vector.extract_strided_slice %79 {offsets = [0, 32], sizes = [8, 8], strides = [1, 1]} : vector<8x64xf32> to vector<8x8xf32>
      %86 = arith.truncf %85 : vector<8x8xf32> to vector<8x8xbf16>
      %c0_47 = arith.constant 0 : index
      %c0_48 = arith.constant 0 : index
      %c0_49 = arith.constant 0 : index
      %87 = vector.load %arg11[%c0_47, %c0_48, %c0_49] : memref<4x8x8xbf16, #tpu.memory_space<vmem>>, vector<1x8x8xbf16>
      %88 = vector.shape_cast %87 : vector<1x8x8xbf16> to vector<8x8xbf16>
      %89 = vector.shape_cast %86 : vector<8x8xbf16> to vector<1x8x8xbf16>
      tpu.vector_store %arg11[%c0_47, %c0_48, %c0_49], %89 {strides = array<i32>} : memref<4x8x8xbf16, #tpu.memory_space<vmem>>, vector<1x8x8xbf16>,
      %90 = vector.extract_strided_slice %79 {offsets = [0, 8], sizes = [8, 8], strides = [1, 1]} : vector<8x64xf32> to vector<8x8xf32>
      %91 = arith.truncf %90 : vector<8x8xf32> to vector<8x8xbf16>
      %c1_50 = arith.constant 1 : index
      %c0_51 = arith.constant 0 : index
      %c0_52 = arith.constant 0 : index
      %92 = vector.load %arg10[%c1_50, %c0_51, %c0_52] : memref<4x8x8xbf16, #tpu.memory_space<vmem>>, vector<1x8x8xbf16>
      %93 = vector.shape_cast %92 : vector<1x8x8xbf16> to vector<8x8xbf16>
      %94 = vector.shape_cast %91 : vector<8x8xbf16> to vector<1x8x8xbf16>
      tpu.vector_store %arg10[%c1_50, %c0_51, %c0_52], %94 {strides = array<i32>} : memref<4x8x8xbf16, #tpu.memory_space<vmem>>, vector<1x8x8xbf16>,
      %95 = vector.extract_strided_slice %79 {offsets = [0, 40], sizes = [8, 8], strides = [1, 1]} : vector<8x64xf32> to vector<8x8xf32>
      %96 = arith.truncf %95 : vector<8x8xf32> to vector<8x8xbf16>
      %c1_53 = arith.constant 1 : index
      %c0_54 = arith.constant 0 : index
      %c0_55 = arith.constant 0 : index
      %97 = vector.load %arg11[%c1_53, %c0_54, %c0_55] : memref<4x8x8xbf16, #tpu.memory_space<vmem>>, vector<1x8x8xbf16>
      %98 = vector.shape_cast %97 : vector<1x8x8xbf16> to vector<8x8xbf16>
      %99 = vector.shape_cast %96 : vector<8x8xbf16> to vector<1x8x8xbf16>
      tpu.vector_store %arg11[%c1_53, %c0_54, %c0_55], %99 {strides = array<i32>} : memref<4x8x8xbf16, #tpu.memory_space<vmem>>, vector<1x8x8xbf16>,
      %100 = vector.extract_strided_slice %79 {offsets = [0, 16], sizes = [8, 8], strides = [1, 1]} : vector<8x64xf32> to vector<8x8xf32>
      %101 = arith.truncf %100 : vector<8x8xf32> to vector<8x8xbf16>
      %c2_56 = arith.constant 2 : index
      %c0_57 = arith.constant 0 : index
      %c0_58 = arith.constant 0 : index
      %102 = vector.load %arg10[%c2_56, %c0_57, %c0_58] : memref<4x8x8xbf16, #tpu.memory_space<vmem>>, vector<1x8x8xbf16>
      %103 = vector.shape_cast %102 : vector<1x8x8xbf16> to vector<8x8xbf16>
      %104 = vector.shape_cast %101 : vector<8x8xbf16> to vector<1x8x8xbf16>
      tpu.vector_store %arg10[%c2_56, %c0_57, %c0_58], %104 {strides = array<i32>} : memref<4x8x8xbf16, #tpu.memory_space<vmem>>, vector<1x8x8xbf16>,
      %105 = vector.extract_strided_slice %79 {offsets = [0, 48], sizes = [8, 8], strides = [1, 1]} : vector<8x64xf32> to vector<8x8xf32>
      %106 = arith.truncf %105 : vector<8x8xf32> to vector<8x8xbf16>
      %c2_59 = arith.constant 2 : index
      %c0_60 = arith.constant 0 : index
      %c0_61 = arith.constant 0 : index
      %107 = vector.load %arg11[%c2_59, %c0_60, %c0_61] : memref<4x8x8xbf16, #tpu.memory_space<vmem>>, vector<1x8x8xbf16>
      %108 = vector.shape_cast %107 : vector<1x8x8xbf16> to vector<8x8xbf16>
      %109 = vector.shape_cast %106 : vector<8x8xbf16> to vector<1x8x8xbf16>
      tpu.vector_store %arg11[%c2_59, %c0_60, %c0_61], %109 {strides = array<i32>} : memref<4x8x8xbf16, #tpu.memory_space<vmem>>, vector<1x8x8xbf16>,
      %110 = vector.extract_strided_slice %79 {offsets = [0, 24], sizes = [8, 8], strides = [1, 1]} : vector<8x64xf32> to vector<8x8xf32>
      %111 = arith.truncf %110 : vector<8x8xf32> to vector<8x8xbf16>
      %c3_62 = arith.constant 3 : index
      %c0_63 = arith.constant 0 : index
      %c0_64 = arith.constant 0 : index
      %112 = vector.load %arg10[%c3_62, %c0_63, %c0_64] : memref<4x8x8xbf16, #tpu.memory_space<vmem>>, vector<1x8x8xbf16>
      %113 = vector.shape_cast %112 : vector<1x8x8xbf16> to vector<8x8xbf16>
      %114 = vector.shape_cast %111 : vector<8x8xbf16> to vector<1x8x8xbf16>
      tpu.vector_store %arg10[%c3_62, %c0_63, %c0_64], %114 {strides = array<i32>} : memref<4x8x8xbf16, #tpu.memory_space<vmem>>, vector<1x8x8xbf16>,
      %115 = vector.extract_strided_slice %79 {offsets = [0, 56], sizes = [8, 8], strides = [1, 1]} : vector<8x64xf32> to vector<8x8xf32>
      %116 = arith.truncf %115 : vector<8x8xf32> to vector<8x8xbf16>
      %c3_65 = arith.constant 3 : index
      %c0_66 = arith.constant 0 : index
      %c0_67 = arith.constant 0 : index
      %117 = vector.load %arg11[%c3_65, %c0_66, %c0_67] : memref<4x8x8xbf16, #tpu.memory_space<vmem>>, vector<1x8x8xbf16>
      %118 = vector.shape_cast %117 : vector<1x8x8xbf16> to vector<8x8xbf16>
      %119 = vector.shape_cast %116 : vector<8x8xbf16> to vector<1x8x8xbf16>
      tpu.vector_store %arg11[%c3_65, %c0_66, %c0_67], %119 {strides = array<i32>} : memref<4x8x8xbf16, #tpu.memory_space<vmem>>, vector<1x8x8xbf16>,
    } else {
    }
    %c8_i32 = arith.constant 8 : i32
    %3 = arith.muli %arg1, %c8_i32 : i32
    %4 = tpu.assume_multiple %3, 8 : i32
    %c0 = arith.constant 0 : index
    %5 = arith.index_cast %4 : i32 to index
    %c0_1 = arith.constant 0 : index
    %6 = vector.load %arg2[%c0, %5, %c0_1] : memref<1x8x32xbf16, #tpu.memory_space<vmem>>, vector<1x8x32xbf16>
    %7 = vector.shape_cast %6 : vector<1x8x32xbf16> to vector<8x32xbf16>
    %c0_2 = arith.constant 0 : index
    %c0_3 = arith.constant 0 : index
    %8 = vector.load %arg3[%c0_2, %c0_3] : memref<32x32xbf16, #tpu.memory_space<vmem>>, vector<32x32xbf16>
    %cst = arith.constant dense<0.000000e+00> : vector<8x32xf32>
    %9 = tpu.matmul %7, %8, %cst {dimension_numbers = #tpu.dot_dimension_numbers<[1], [0], [0], [1], [0, 0, 1, 1], [], []>} : vector<8x32xbf16>, vector<32x32xbf16>, vector<8x32xf32> -> vector<8x32xf32>
    %c0_4 = arith.constant 0 : index
    %c0_5 = arith.constant 0 : index
    %10 = vector.load %arg4[%c0_4, %c0_5] : memref<1x32xf32, #tpu.memory_space<vmem>>, vector<1x32xf32>
    %11 = vector.shape_cast %10 : vector<1x32xf32> to vector<32xf32>
    %12 = vector.shape_cast %11 : vector<32xf32> to vector<1x32xf32>
    %13 = vector.broadcast %12 : vector<1x32xf32> to vector<8x32xf32>
    %14 = arith.addf %9, %13 : vector<8x32xf32>
    %15 = vector.extract_strided_slice %14 {offsets = [0, 0], sizes = [8, 8], strides = [1, 1]} : vector<8x32xf32> to vector<8x8xf32>
    %16 = arith.truncf %15 : vector<8x8xf32> to vector<8x8xbf16>
    %c0_6 = arith.constant 0 : index
    %c0_7 = arith.constant 0 : index
    %c0_8 = arith.constant 0 : index
    %17 = vector.load %arg12[%c0_6, %c0_7, %c0_8] : memref<4x8x8xbf16, #tpu.memory_space<vmem>>, vector<1x8x8xbf16>
    %18 = vector.shape_cast %17 : vector<1x8x8xbf16> to vector<8x8xbf16>
    %19 = vector.shape_cast %16 : vector<8x8xbf16> to vector<1x8x8xbf16>
    tpu.vector_store %arg12[%c0_6, %c0_7, %c0_8], %19 {strides = array<i32>} : memref<4x8x8xbf16, #tpu.memory_space<vmem>>, vector<1x8x8xbf16>,
    %20 = vector.extract_strided_slice %14 {offsets = [0, 8], sizes = [8, 8], strides = [1, 1]} : vector<8x32xf32> to vector<8x8xf32>
    %21 = arith.truncf %20 : vector<8x8xf32> to vector<8x8xbf16>
    %c1 = arith.constant 1 : index
    %c0_9 = arith.constant 0 : index
    %c0_10 = arith.constant 0 : index
    %22 = vector.load %arg12[%c1, %c0_9, %c0_10] : memref<4x8x8xbf16, #tpu.memory_space<vmem>>, vector<1x8x8xbf16>
    %23 = vector.shape_cast %22 : vector<1x8x8xbf16> to vector<8x8xbf16>
    %24 = vector.shape_cast %21 : vector<8x8xbf16> to vector<1x8x8xbf16>
    tpu.vector_store %arg12[%c1, %c0_9, %c0_10], %24 {strides = array<i32>} : memref<4x8x8xbf16, #tpu.memory_space<vmem>>, vector<1x8x8xbf16>,
    %25 = vector.extract_strided_slice %14 {offsets = [0, 16], sizes = [8, 8], strides = [1, 1]} : vector<8x32xf32> to vector<8x8xf32>
    %26 = arith.truncf %25 : vector<8x8xf32> to vector<8x8xbf16>
    %c2 = arith.constant 2 : index
    %c0_11 = arith.constant 0 : index
    %c0_12 = arith.constant 0 : index
    %27 = vector.load %arg12[%c2, %c0_11, %c0_12] : memref<4x8x8xbf16, #tpu.memory_space<vmem>>, vector<1x8x8xbf16>
    %28 = vector.shape_cast %27 : vector<1x8x8xbf16> to vector<8x8xbf16>
    %29 = vector.shape_cast %26 : vector<8x8xbf16> to vector<1x8x8xbf16>
    tpu.vector_store %arg12[%c2, %c0_11, %c0_12], %29 {strides = array<i32>} : memref<4x8x8xbf16, #tpu.memory_space<vmem>>, vector<1x8x8xbf16>,
    %30 = vector.extract_strided_slice %14 {offsets = [0, 24], sizes = [8, 8], strides = [1, 1]} : vector<8x32xf32> to vector<8x8xf32>
    %31 = arith.truncf %30 : vector<8x8xf32> to vector<8x8xbf16>
    %c3 = arith.constant 3 : index
    %c0_13 = arith.constant 0 : index
    %c0_14 = arith.constant 0 : index
    %32 = vector.load %arg12[%c3, %c0_13, %c0_14] : memref<4x8x8xbf16, #tpu.memory_space<vmem>>, vector<1x8x8xbf16>
    %33 = vector.shape_cast %32 : vector<1x8x8xbf16> to vector<8x8xbf16>
    %34 = vector.shape_cast %31 : vector<8x8xbf16> to vector<1x8x8xbf16>
    tpu.vector_store %arg12[%c3, %c0_13, %c0_14], %34 {strides = array<i32>} : memref<4x8x8xbf16, #tpu.memory_space<vmem>>, vector<1x8x8xbf16>,
    %c0_15 = arith.constant 0 : index
    %c0_16 = arith.constant 0 : index
    %c0_17 = arith.constant 0 : index
    %35 = vector.load %arg12[%c0_15, %c0_16, %c0_17] : memref<4x8x8xbf16, #tpu.memory_space<vmem>>, vector<4x8x8xbf16>
    %c0_18 = arith.constant 0 : index
    %c0_19 = arith.constant 0 : index
    %c0_20 = arith.constant 0 : index
    %36 = vector.load %arg10[%c0_18, %c0_19, %c0_20] : memref<4x8x8xbf16, #tpu.memory_space<vmem>>, vector<4x8x8xbf16>
    %c0_21 = arith.constant 0 : index
    %c0_22 = arith.constant 0 : index
    %c0_23 = arith.constant 0 : index
    %37 = vector.load %arg11[%c0_21, %c0_22, %c0_23] : memref<4x8x8xbf16, #tpu.memory_space<vmem>>, vector<4x8x8xbf16>
    "tpu.trace_start"() <{level = 10 : i32, message = "hqd,hkd->hqk"}> : () -> ()
    %cst_24 = arith.constant dense<0.000000e+00> : vector<4x8x8xf32>
    %38 = tpu.matmul %35, %36, %cst_24 {dimension_numbers = #tpu.dot_dimension_numbers<[2], [2], [1], [1], [0, 0, 0, 1, 1, 1], [0], [0]>} : vector<4x8x8xbf16>, vector<4x8x8xbf16>, vector<4x8x8xf32> -> vector<4x8x8xf32>
    "tpu.trace_stop"() : () -> ()
    %cst_25 = arith.constant dense<0xFF800000> : vector<4x8xf32>
    %39 = vector.multi_reduction <maximumf>, %38, %cst_25 [2] : vector<4x8x8xf32> to vector<4x8xf32>
    %40 = vector.shape_cast %39 : vector<4x8xf32> to vector<4x8x1xf32>
    %41 = vector.broadcast %40 : vector<4x8x1xf32> to vector<4x8x8xf32>
    %42 = arith.subf %38, %41 : vector<4x8x8xf32>
    %43 = math.exp %42 : vector<4x8x8xf32>
    %cst_26 = arith.constant dense<0.000000e+00> : vector<4x8xf32>
    %44 = vector.multi_reduction <add>, %43, %cst_26 [2] : vector<4x8x8xf32> to vector<4x8xf32>
    %45 = vector.shape_cast %44 : vector<4x8xf32> to vector<4x8x1xf32>
    %46 = tpu.reciprocal %45 {approx = true} : vector<4x8x1xf32> -> vector<4x8x1xf32>
    %47 = vector.broadcast %46 : vector<4x8x1xf32> to vector<4x8x8xf32>
    %48 = arith.mulf %43, %47 : vector<4x8x8xf32>
    %49 = arith.truncf %48 : vector<4x8x8xf32> to vector<4x8x8xbf16>
    "tpu.trace_start"() <{level = 10 : i32, message = "hqk,hkd->hqd"}> : () -> ()
    %cst_27 = arith.constant dense<0.000000e+00> : vector<4x8x8xf32>
    %50 = tpu.matmul %49, %37, %cst_27 {dimension_numbers = #tpu.dot_dimension_numbers<[2], [1], [1], [2], [0, 0, 0, 1, 1, 2], [0], [0]>} : vector<4x8x8xbf16>, vector<4x8x8xbf16>, vector<4x8x8xf32> -> vector<4x8x8xf32>
    "tpu.trace_stop"() : () -> ()
    %51 = vector.extract_strided_slice %50 {offsets = [0, 0, 0], sizes = [1, 8, 8], strides = [1, 1, 1]} : vector<4x8x8xf32> to vector<1x8x8xf32>
    %52 = vector.shape_cast %51 : vector<1x8x8xf32> to vector<8x8xf32>
    %53 = vector.extract_strided_slice %50 {offsets = [1, 0, 0], sizes = [1, 8, 8], strides = [1, 1, 1]} : vector<4x8x8xf32> to vector<1x8x8xf32>
    %54 = vector.shape_cast %53 : vector<1x8x8xf32> to vector<8x8xf32>
    %55 = vector.extract_strided_slice %50 {offsets = [2, 0, 0], sizes = [1, 8, 8], strides = [1, 1, 1]} : vector<4x8x8xf32> to vector<1x8x8xf32>
    %56 = vector.shape_cast %55 : vector<1x8x8xf32> to vector<8x8xf32>
    %57 = vector.extract_strided_slice %50 {offsets = [3, 0, 0], sizes = [1, 8, 8], strides = [1, 1, 1]} : vector<4x8x8xf32> to vector<1x8x8xf32>
    %58 = vector.shape_cast %57 : vector<1x8x8xf32> to vector<8x8xf32>
    %59 = tpu.concatenate %52, %54, %56, %58 in 1 : vector<8x8xf32>, vector<8x8xf32>, vector<8x8xf32>, vector<8x8xf32> -> vector<8x32xf32>
    %60 = arith.truncf %59 : vector<8x32xf32> to vector<8x32xbf16>
    %c0_28 = arith.constant 0 : index
    %c0_29 = arith.constant 0 : index
    %61 = vector.load %arg7[%c0_28, %c0_29] : memref<32x32xbf16, #tpu.memory_space<vmem>>, vector<32x32xbf16>
    %cst_30 = arith.constant dense<0.000000e+00> : vector<8x32xf32>
    %62 = tpu.matmul %60, %61, %cst_30 {dimension_numbers = #tpu.dot_dimension_numbers<[1], [0], [0], [1], [0, 0, 1, 1], [], []>} : vector<8x32xbf16>, vector<32x32xbf16>, vector<8x32xf32> -> vector<8x32xf32>
    %c0_31 = arith.constant 0 : index
    %c0_32 = arith.constant 0 : index
    %63 = vector.load %arg8[%c0_31, %c0_32] : memref<1x32xf32, #tpu.memory_space<vmem>>, vector<1x32xf32>
    %64 = vector.shape_cast %63 : vector<1x32xf32> to vector<32xf32>
    %65 = vector.shape_cast %64 : vector<32xf32> to vector<1x32xf32>
    %66 = vector.broadcast %65 : vector<1x32xf32> to vector<8x32xf32>
    %67 = arith.addf %62, %66 : vector<8x32xf32>
    %c0_33 = arith.constant 0 : index
    %c0_34 = arith.constant 0 : index
    %c0_35 = arith.constant 0 : index
    %68 = vector.load %arg9[%c0_33, %c0_34, %c0_35] : memref<1x8x32xf32, #tpu.memory_space<vmem>>, vector<1x8x32xf32>
    %69 = vector.shape_cast %68 : vector<1x8x32xf32> to vector<8x32xf32>
    %70 = vector.shape_cast %67 : vector<8x32xf32> to vector<1x8x32xf32>
    tpu.vector_store %arg9[%c0_33, %c0_34, %c0_35], %70 {strides = array<i32>} : memref<1x8x32xf32, #tpu.memory_space<vmem>>, vector<1x8x32xf32>,
    return
  }
  func.func @transform_0(%arg0: i32, %arg1: i32) -> (i32, i32, i32) {
    %c0_i32 = arith.constant 0 : i32
    %c0_i32_0 = arith.constant 0 : i32
    %c0_i32_1 = arith.constant 0 : i32
    return %arg0, %c0_i32, %c0_i32_0 : i32, i32, i32
  }
  func.func @transform_1(%arg0: i32, %arg1: i32) -> (i32, i32) {
    %c0_i32 = arith.constant 0 : i32
    %c0_i32_0 = arith.constant 0 : i32
    %c0_i32_1 = arith.constant 0 : i32
    return %c0_i32, %c0_i32_0 : i32, i32
  }
  func.func @transform_2(%arg0: i32, %arg1: i32) -> (i32, i32) {
    %c0_i32 = arith.constant 0 : i32
    %c0_i32_0 = arith.constant 0 : i32
    %c0_i32_1 = arith.constant 0 : i32
    return %c0_i32, %c0_i32_0 : i32, i32
  }
  func.func @transform_3(%arg0: i32, %arg1: i32) -> (i32, i32) {
    %c0_i32 = arith.constant 0 : i32
    %c0_i32_0 = arith.constant 0 : i32
    %c0_i32_1 = arith.constant 0 : i32
    return %c0_i32, %c0_i32_0 : i32, i32
  }
  func.func @transform_4(%arg0: i32, %arg1: i32) -> (i32, i32) {
    %c0_i32 = arith.constant 0 : i32
    %c0_i32_0 = arith.constant 0 : i32
    %c0_i32_1 = arith.constant 0 : i32
    return %c0_i32, %c0_i32_0 : i32, i32
  }
  func.func @transform_5(%arg0: i32, %arg1: i32) -> (i32, i32) {
    %c0_i32 = arith.constant 0 : i32
    %c0_i32_0 = arith.constant 0 : i32
    %c0_i32_1 = arith.constant 0 : i32
    return %c0_i32, %c0_i32_0 : i32, i32
  }
  func.func @transform_6(%arg0: i32, %arg1: i32) -> (i32, i32) {
    %c0_i32 = arith.constant 0 : i32
    %c0_i32_0 = arith.constant 0 : i32
    %c0_i32_1 = arith.constant 0 : i32
    return %c0_i32, %c0_i32_0 : i32, i32
  }
  func.func @transform_7(%arg0: i32, %arg1: i32) -> (i32, i32, i32) {
    %c0_i32 = arith.constant 0 : i32
    %c0_i32_0 = arith.constant 0 : i32
    return %arg0, %arg1, %c0_i32 : i32, i32, i32
  }
}

</mosaic_0001>

<llo_original>
// kernel: tpu_custom_call.1
$region0: #{tpu_custom_call.1}
  #allocation0 [shape = 'u32[]', space=smem, size = 0x4, offset = 0x4, fixed_abs, tag = 'smem constant byte address 0x4 - core index']
  #allocation1 [shape = 'u32[144,128]{1,0:T(1,128)}', space=vmem, size = 0x12000, scoped, tag = 'internal scratch']
  #allocation2 [shape = 'bf16[4,8,8]{2,1,0:T(8,128)(2,1)}', space=vmem, size = 0x2000, scoped, tag = 'scratch operand']
  #allocation3 [shape = 'bf16[4,8,8]{2,1,0:T(8,128)(2,1)}', space=vmem, size = 0x2000, scoped, tag = 'scratch operand']
  #allocation4 [shape = 'bf16[4,8,8]{2,1,0:T(8,128)(2,1)}', space=vmem, size = 0x2000, scoped, tag = 'scratch operand']
  %s0 = inlined_call_operand.hbm [shape: bf16[2,8,32], index: 0, kind: input, shape index: {}]
  %s1 = inlined_call_operand.hbm [shape: bf16[32,32], index: 1, kind: input, shape index: {}]
  %s2 = inlined_call_operand.hbm [shape: f32[1,32], index: 2, kind: input, shape index: {}]
  %s3 = inlined_call_operand.hbm [shape: bf16[32,64], index: 3, kind: input, shape index: {}]
  %s4 = inlined_call_operand.hbm [shape: f32[1,64], index: 4, kind: input, shape index: {}]
  %s5 = inlined_call_operand.hbm [shape: bf16[32,32], index: 5, kind: input, shape index: {}]
  %s6 = inlined_call_operand.hbm [shape: f32[1,32], index: 6, kind: input, shape index: {}]
  %s7 = inlined_call_operand.hbm [shape: f32[2,8,32], index: 7, kind: output, shape index: {}]
  %s8 = sld [smem:[#allocation0]]
  $region93: #{tpu_custom_call.1} parent=0
    _
  %s10 = ssub.s32 1, %s8
  %s11 = scalar_select 0, %s10, %s8
  $region1: #{tpu_custom_call.1} parent=0
    #allocation5 [shape = 'u8[4096]{0}', space=vmem, size = 0x1000, scoped, tag = 'input window, operand 0']
    #allocation6 [shape = 's32[2]{0}', space=sflag, size = 0x8, scoped, tag = 'scoped memory for tpu_custom_call.1']
    #allocation7 [shape = 's32[2]{0}', space=sflag, size = 0x8, scoped, tag = 'scoped memory for tpu_custom_call.1']
    #allocation8 [shape = 'u8[8192]{0}', space=vmem, size = 0x2000, scoped, tag = 'input window, operand 1, single buffered']
    #allocation9 [shape = 's32[1]{0}', space=sflag, size = 0x4, scoped, tag = 'scoped memory for tpu_custom_call.1']
    #allocation10 [shape = 'u8[512]{0}', space=vmem, size = 0x400, scoped, tag = 'input window, operand 2, single buffered']
    #allocation11 [shape = 'u8[8192]{0}', space=vmem, size = 0x2000, scoped, tag = 'input window, operand 3, single buffered']
    #allocation12 [shape = 's32[1]{0}', space=sflag, size = 0x4, scoped, tag = 'scoped memory for tpu_custom_call.1']
    #allocation13 [shape = 'u8[512]{0}', space=vmem, size = 0x400, scoped, tag = 'input window, operand 4, single buffered']
    #allocation14 [shape = 'u8[8192]{0}', space=vmem, size = 0x2000, scoped, tag = 'input window, operand 5, single buffered']
    #allocation15 [shape = 's32[1]{0}', space=sflag, size = 0x4, scoped, tag = 'scoped memory for tpu_custom_call.1']
    #allocation16 [shape = 'u8[512]{0}', space=vmem, size = 0x400, scoped, tag = 'input window, operand 6, single buffered']
    #allocation17 [shape = 'u8[8192]{0}', space=vmem, size = 0x2000, scoped, tag = 'output window, operand 0']
    %12 = vsyncpa [#allocation6], 0
    %s13 = scalar_lea.sflag [#allocation6], 1
    %14 = vsyncpa %s13, 0
    %15 = vsyncpa [#allocation9], 0
    %16 = vsyncpa [#allocation12], 0
    %17 = vsyncpa [#allocation15], 0
    %18 = vsyncpa [#allocation7], 0
    %s19 = scalar_lea.sflag [#allocation7], 1
    %20 = vsyncpa %s19, 0
    loop: start=0, step=1, limit=4
    $region2: #{tpu_custom_call.1} parent=1 // loop_pre_header
      _
    $region3: #{tpu_custom_call.1} parent=1 // loop_header
      %s22 = sphi 0, %s26
      %p23 = scmp.ge.s32.totalorder %s22, 4
      %s29 = sphi 0, %s41
      %s30 = sphi 0, %s37
      %s31 = sphi 0, %s29
      %s32 = sphi 0, %s30
      %s33 = sphi 0, %s31
      %s34 = sphi 0, %s32
      %s44 = sphi 0, %s46
      %s47 = sphi 0, %s44
      %s48 = sphi 0, %s47
      %s64 = sphi 0, %s48
      %s68 = sphi 0, %s68
      %s70 = sphi 0, %s68
      %s71 = sphi 0, %s70
      %s85 = sphi 0, %s71
      %s89 = sphi 0, %s89
      %s91 = sphi 0, %s89
      %s92 = sphi 0, %s91
      %s106 = sphi 0, %s92
      %s110 = sphi 0, %s110
      %s112 = sphi 0, %s110
      %s113 = sphi 0, %s112
      %s127 = sphi 0, %s113
      %s131 = sphi 0, %s131
      %s133 = sphi 0, %s131
      %s134 = sphi 0, %s133
      %s148 = sphi 0, %s134
      %s152 = sphi 0, %s152
      %s154 = sphi 0, %s152
      %s155 = sphi 0, %s154
      %s169 = sphi 0, %s155
      %s173 = sphi 0, %s173
      %s175 = sphi 0, %s173
      %s176 = sphi 0, %s175
      %s190 = sphi 0, %s176
      %s198 = sphi 0, %s200
      %s201 = sphi 0, %s198
      %s202 = sphi 0, %s201
      %s218 = sphi 0, %s202
    $region4: #{tpu_custom_call.1} parent=1 // loop_header_branch
      %25 = sbr.rel (%p23) target = $region8
    $region5: #{tpu_custom_call.1} parent=1 // loop_body
      %s27 = ssub.s32 %s22, 1
      %s28 = ssub.s32 %s22, 2
      %s35 = sadd.s32 1, %s30
      %p36 = scmp.ge.s32.totalorder %s35, 1
      %s37 = scalar_select %p36, 0, %s35
      %s38 = sadd.s32 1, %s29
      %s39 = scalar_select %p36, %s38, %s29
      %p40 = scmp.ge.s32.totalorder %s39, 2
      %s41 = scalar_select %p40, 0, %s39
      %s42 = ssub.s32 %s29, %s41
      %p43 = scmp.eq.s32.totalorder %s42, 0
      %s45 = sadd.s32 %s44, 1
      %s46 = scalar_select %p43, %s44, %s45
      %p49 = pneg %p43
      %p50 = scmp.eq.s32.totalorder %s22, 1
      %p51 = por %p49, %p50
      %p52 = scmp.ne.s32.totalorder %s44, %s47
      %p53 = scmp.eq.s32.totalorder %s22, 0
      %p54 = por %p52, %p53
      %p55 = scmp.ne.s32.totalorder %s44, %s47
      %p56 = scmp.eq.s32.totalorder %s27, 1
      %p57 = por %p55, %p56
      %p58 = scmp.ne.s32.totalorder %s47, %s48
      %p59 = scmp.eq.s32.totalorder %s27, 0
      %p60 = por %p58, %p59
      %p61 = scmp.ne.s32.totalorder %s47, %s48
      %p62 = scmp.eq.s32.totalorder %s28, 1
      %p63 = por %p61, %p62
      %p65 = scmp.ne.s32.totalorder %s48, %s64
      %p66 = scmp.eq.s32.totalorder %s28, 0
      %p67 = por %p65, %p66
      %s69 = sadd.s32 %s68, 1
      %p72 = scmp.eq.s32.totalorder %s22, 1
      %p73 = scmp.ne.s32.totalorder %s68, %s70
      %p74 = scmp.eq.s32.totalorder %s22, 0
      %p75 = por %p73, %p74
      %p76 = scmp.ne.s32.totalorder %s68, %s70
      %p77 = scmp.eq.s32.totalorder %s27, 1
      %p78 = por %p76, %p77
      %p79 = scmp.ne.s32.totalorder %s70, %s71
      %p80 = scmp.eq.s32.totalorder %s27, 0
      %p81 = por %p79, %p80
      %p82 = scmp.ne.s32.totalorder %s70, %s71
      %p83 = scmp.eq.s32.totalorder %s28, 1
      %p84 = por %p82, %p83
      %p86 = scmp.ne.s32.totalorder %s71, %s85
      %p87 = scmp.eq.s32.totalorder %s28, 0
      %p88 = por %p86, %p87
      %s90 = sadd.s32 %s89, 1
      %p93 = scmp.eq.s32.totalorder %s22, 1
      %p94 = scmp.ne.s32.totalorder %s89, %s91
      %p95 = scmp.eq.s32.totalorder %s22, 0
      %p96 = por %p94, %p95
      %p97 = scmp.ne.s32.totalorder %s89, %s91
      %p98 = scmp.eq.s32.totalorder %s27, 1
      %p99 = por %p97, %p98
      %p100 = scmp.ne.s32.totalorder %s91, %s92
      %p101 = scmp.eq.s32.totalorder %s27, 0
      %p102 = por %p100, %p101
      %p103 = scmp.ne.s32.totalorder %s91, %s92
      %p104 = scmp.eq.s32.totalorder %s28, 1
      %p105 = por %p103, %p104
      %p107 = scmp.ne.s32.totalorder %s92, %s106
      %p108 = scmp.eq.s32.totalorder %s28, 0
      %p109 = por %p107, %p108
      %s111 = sadd.s32 %s110, 1
      %p114 = scmp.eq.s32.totalorder %s22, 1
      %p115 = scmp.ne.s32.totalorder %s110, %s112
      %p116 = scmp.eq.s32.totalorder %s22, 0
      %p117 = por %p115, %p116
      %p118 = scmp.ne.s32.totalorder %s110, %s112
      %p119 = scmp.eq.s32.totalorder %s27, 1
      %p120 = por %p118, %p119
      %p121 = scmp.ne.s32.totalorder %s112, %s113
      %p122 = scmp.eq.s32.totalorder %s27, 0
      %p123 = por %p121, %p122
      %p124 = scmp.ne.s32.totalorder %s112, %s113
      %p125 = scmp.eq.s32.totalorder %s28, 1
      %p126 = por %p124, %p125
      %p128 = scmp.ne.s32.totalorder %s113, %s127
      %p129 = scmp.eq.s32.totalorder %s28, 0
      %p130 = por %p128, %p129
      %s132 = sadd.s32 %s131, 1
      %p135 = scmp.eq.s32.totalorder %s22, 1
      %p136 = scmp.ne.s32.totalorder %s131, %s133
      %p137 = scmp.eq.s32.totalorder %s22, 0
      %p138 = por %p136, %p137
      %p139 = scmp.ne.s32.totalorder %s131, %s133
      %p140 = scmp.eq.s32.totalorder %s27, 1
      %p141 = por %p139, %p140
      %p142 = scmp.ne.s32.totalorder %s133, %s134
      %p143 = scmp.eq.s32.totalorder %s27, 0
      %p144 = por %p142, %p143
      %p145 = scmp.ne.s32.totalorder %s133, %s134
      %p146 = scmp.eq.s32.totalorder %s28, 1
      %p147 = por %p145, %p146
      %p149 = scmp.ne.s32.totalorder %s134, %s148
      %p150 = scmp.eq.s32.totalorder %s28, 0
      %p151 = por %p149, %p150
      %s153 = sadd.s32 %s152, 1
      %p156 = scmp.eq.s32.totalorder %s22, 1
      %p157 = scmp.ne.s32.totalorder %s152, %s154
      %p158 = scmp.eq.s32.totalorder %s22, 0
      %p159 = por %p157, %p158
      %p160 = scmp.ne.s32.totalorder %s152, %s154
      %p161 = scmp.eq.s32.totalorder %s27, 1
      %p162 = por %p160, %p161
      %p163 = scmp.ne.s32.totalorder %s154, %s155
      %p164 = scmp.eq.s32.totalorder %s27, 0
      %p165 = por %p163, %p164
      %p166 = scmp.ne.s32.totalorder %s154, %s155
      %p167 = scmp.eq.s32.totalorder %s28, 1
      %p168 = por %p166, %p167
      %p170 = scmp.ne.s32.totalorder %s155, %s169
      %p171 = scmp.eq.s32.totalorder %s28, 0
      %p172 = por %p170, %p171
      %s174 = sadd.s32 %s173, 1
      %p177 = scmp.eq.s32.totalorder %s22, 1
      %p178 = scmp.ne.s32.totalorder %s173, %s175
      %p179 = scmp.eq.s32.totalorder %s22, 0
      %p180 = por %p178, %p179
      %p181 = scmp.ne.s32.totalorder %s173, %s175
      %p182 = scmp.eq.s32.totalorder %s27, 1
      %p183 = por %p181, %p182
      %p184 = scmp.ne.s32.totalorder %s175, %s176
      %p185 = scmp.eq.s32.totalorder %s27, 0
      %p186 = por %p184, %p185
      %p187 = scmp.ne.s32.totalorder %s175, %s176
      %p188 = scmp.eq.s32.totalorder %s28, 1
      %p189 = por %p187, %p188
      %p191 = scmp.ne.s32.totalorder %s176, %s190
      %p192 = scmp.eq.s32.totalorder %s28, 0
      %p193 = por %p191, %p192
      %s194 = ssub.s32 %s29, %s41
      %s195 = ssub.s32 %s30, %s37
      %s196 = sor.u32 %s194, %s195
      %p197 = scmp.eq.s32.totalorder %s196, 0
      %s199 = sadd.s32 %s198, 1
      %s200 = scalar_select %p197, %s198, %s199
      %p203 = pneg %p197
      %p204 = scmp.eq.s32.totalorder %s22, 1
      %p205 = por %p203, %p204
      %p206 = scmp.ne.s32.totalorder %s198, %s201
      %p207 = scmp.eq.s32.totalorder %s22, 0
      %p208 = por %p206, %p207
      %p209 = scmp.ne.s32.totalorder %s198, %s201
      %p210 = scmp.eq.s32.totalorder %s27, 1
      %p211 = por %p209, %p210
      %p212 = scmp.ne.s32.totalorder %s201, %s202
      %p213 = scmp.eq.s32.totalorder %s27, 0
      %p214 = por %p212, %p213
      %p215 = scmp.ne.s32.totalorder %s201, %s202
      %p216 = scmp.eq.s32.totalorder %s28, 1
      %p217 = por %p215, %p216
      %p219 = scmp.ne.s32.totalorder %s202, %s218
      %p220 = scmp.eq.s32.totalorder %s28, 0
      %p221 = por %p219, %p220
      %p222 = scmp.le.s32.totalorder 1, %s22
      %p223 = scmp.lt.s32.totalorder %s22, 3
      %p224 = pnand %p222, %p223
      %p225 = pneg %p224
      // Predicated region
      $region9: #{tpu_custom_call.1} parent=5 // pred_check
        _
      $region10: #{tpu_custom_call.1} parent=5 // pred_check_branch
        %227 = sbr.rel (%p224) target = $region12
      $region11: #{tpu_custom_call.1} parent=5 // pred_region
        %s228 = ssub.s32 %s22, 1
        // Predicated region
        $region13: #{tpu_custom_call.1} parent=11 // pred_check
          %p229 = pneg %p81
        $region14: #{tpu_custom_call.1} parent=11 // pred_check_branch
          %231 = sbr.rel (%p229) target = $region16
        $region15: #{tpu_custom_call.1} parent=11 // pred_region
          %s233 = ssub.s32 256, 256
          %234 = vsyncadd [#allocation9], %s233
          %s235 = sshll.u32 [#allocation8], 4
          %s236 = int_to_ptr.vmem [resolvable:$true] %s235
          %241 = dma.hbm_to_vmem [thread:$0]  %s1, 256, %s236, [#allocation9], 64, 64, 4
        $region16: #{tpu_custom_call.1} parent=11 // pred_fallthru
          _
        // Predicated region
        $region17: #{tpu_custom_call.1} parent=11 // pred_check
          %p242 = pneg %p102
        $region18: #{tpu_custom_call.1} parent=11 // pred_check_branch
          %244 = sbr.rel (%p242) target = $region20
        $region19: #{tpu_custom_call.1} parent=11 // pred_region
          %s246 = ssub.s32 16, 16
          %247 = vsyncadd [#allocation9], %s246
          %s249 = sshll.u32 [#allocation10], 4
          %s250 = int_to_ptr.vmem [resolvable:$true] %s249
          %252 = dma.hbm_to_vmem [thread:$0]  %s2, 16, %s250, [#allocation9]
        $region20: #{tpu_custom_call.1} parent=11 // pred_fallthru
          _
        // Predicated region
        $region21: #{tpu_custom_call.1} parent=11 // pred_check
          %p253 = pneg %p123
        $region22: #{tpu_custom_call.1} parent=11 // pred_check_branch
          %255 = sbr.rel (%p253) target = $region24
        $region23: #{tpu_custom_call.1} parent=11 // pred_region
          %s257 = ssub.s32 256, 256
          %258 = vsyncadd [#allocation12], %s257
          %s259 = sshll.u32 [#allocation11], 4
          %s260 = int_to_ptr.vmem [resolvable:$true] %s259
          %265 = dma.hbm_to_vmem [thread:$0]  %s3, 256, %s260, [#allocation12], 64, 64, 4
        $region24: #{tpu_custom_call.1} parent=11 // pred_fallthru
          _
        // Predicated region
        $region25: #{tpu_custom_call.1} parent=11 // pred_check
          %p266 = pneg %p144
        $region26: #{tpu_custom_call.1} parent=11 // pred_check_branch
          %268 = sbr.rel (%p266) target = $region28
        $region27: #{tpu_custom_call.1} parent=11 // pred_region
          %s270 = ssub.s32 16, 16
          %271 = vsyncadd [#allocation12], %s270
          %s273 = sshll.u32 [#allocation13], 4
          %s274 = int_to_ptr.vmem [resolvable:$true] %s273
          %276 = dma.hbm_to_vmem [thread:$0]  %s4, 16, %s274, [#allocation12]
        $region28: #{tpu_custom_call.1} parent=11 // pred_fallthru
          _
        // Predicated region
        $region29: #{tpu_custom_call.1} parent=11 // pred_check
          %p277 = pneg %p165
        $region30: #{tpu_custom_call.1} parent=11 // pred_check_branch
          %279 = sbr.rel (%p277) target = $region32
        $region31: #{tpu_custom_call.1} parent=11 // pred_region
          %s281 = ssub.s32 256, 256
          %282 = vsyncadd [#allocation15], %s281
          %s283 = sshll.u32 [#allocation14], 4
          %s284 = int_to_ptr.vmem [resolvable:$true] %s283
          %289 = dma.hbm_to_vmem [thread:$0]  %s5, 256, %s284, [#allocation15], 64, 64, 4
        $region32: #{tpu_custom_call.1} parent=11 // pred_fallthru
          _
        // Predicated region
        $region33: #{tpu_custom_call.1} parent=11 // pred_check
          %p290 = pneg %p186
        $region34: #{tpu_custom_call.1} parent=11 // pred_check_branch
          %292 = sbr.rel (%p290) target = $region36
        $region35: #{tpu_custom_call.1} parent=11 // pred_region
          %s294 = ssub.s32 16, 16
          %295 = vsyncadd [#allocation15], %s294
          %s297 = sshll.u32 [#allocation16], 4
          %s298 = int_to_ptr.vmem [resolvable:$true] %s297
          %300 = dma.hbm_to_vmem [thread:$0]  %s6, 16, %s298, [#allocation15]
        $region36: #{tpu_custom_call.1} parent=11 // pred_fallthru
          _
      $region12: #{tpu_custom_call.1} parent=5 // pred_fallthru
        _
      %p301 = scmp.lt.s32.totalorder %s22, 2
      // Predicated region
      $region37: #{tpu_custom_call.1} parent=5 // pred_check
        %p302 = pneg %p301
      $region38: #{tpu_custom_call.1} parent=5 // pred_check_branch
        %304 = sbr.rel (%p302) target = $region40
      $region39: #{tpu_custom_call.1} parent=5 // pred_region
        // Predicated region
        $region41: #{tpu_custom_call.1} parent=39 // pred_check
          %p305 = pneg %p54
        $region42: #{tpu_custom_call.1} parent=39 // pred_check_branch
          %307 = sbr.rel (%p305) target = $region44
        $region43: #{tpu_custom_call.1} parent=39 // pred_region
          %s308 = sand.u32 %s44, 1
          %s309 = scalar_lea.sflag [#allocation6], %s308
          %s310 = sand.u32 %s44, 1
          %s311 = smul.addr %s310, 4
          %s312 = scalar_lea.vmem [#allocation5], %s311
          %s314 = ssub.s32 64, 64
          %315 = vsyncadd %s309, %s314
          %s316 = smul.addr %s29, 64
          %s317 = scalar_lea.hbm %s0, %s316
          %s319 = sshll.u32 %s312, 4
          %s320 = int_to_ptr.vmem [resolvable:$true] %s319
          %322 = dma.hbm_to_vmem [thread:$0]  %s317, 64, %s320, %s309
        $region44: #{tpu_custom_call.1} parent=39 // pred_fallthru
          _
      $region40: #{tpu_custom_call.1} parent=5 // pred_fallthru
        _
      %p323 = scmp.le.s32.totalorder 1, %s22
      %p324 = scmp.lt.s32.totalorder %s22, 3
      %p325 = pnand %p323, %p324
      %p326 = pneg %p325
      // Predicated region
      $region45: #{tpu_custom_call.1} parent=5 // pred_check
        _
      $region46: #{tpu_custom_call.1} parent=5 // pred_check_branch
        %328 = sbr.rel (%p325) target = $region48
      $region47: #{tpu_custom_call.1} parent=5 // pred_region
        %s329 = ssub.s32 %s22, 1
        %s330 = sand.u32 %s47, 1
        %s331 = scalar_lea.sflag [#allocation6], %s330
        %s332 = sand.u32 %s47, 1
        %s333 = smul.addr %s332, 4
        %s334 = scalar_lea.vmem [#allocation5], %s333
        // Predicated region
        $region49: #{tpu_custom_call.1} parent=47 // pred_check
          %p335 = pneg %p60
        $region50: #{tpu_custom_call.1} parent=47 // pred_check_branch
          %337 = sbr.rel (%p335) target = $region52
        $region51: #{tpu_custom_call.1} parent=47 // pred_region
          %338 = dma.done %s331, 64
        $region52: #{tpu_custom_call.1} parent=47 // pred_fallthru
          _
        // Predicated region
        $region53: #{tpu_custom_call.1} parent=47 // pred_check
          %p339 = pneg %p81
        $region54: #{tpu_custom_call.1} parent=47 // pred_check_branch
          %341 = sbr.rel (%p339) target = $region56
        $region55: #{tpu_custom_call.1} parent=47 // pred_region
          %342 = dma.done [#allocation9], 256
        $region56: #{tpu_custom_call.1} parent=47 // pred_fallthru
          _
        // Predicated region
        $region57: #{tpu_custom_call.1} parent=47 // pred_check
          %p343 = pneg %p102
        $region58: #{tpu_custom_call.1} parent=47 // pred_check_branch
          %345 = sbr.rel (%p343) target = $region60
        $region59: #{tpu_custom_call.1} parent=47 // pred_region
          %346 = dma.done [#allocation9], 16
        $region60: #{tpu_custom_call.1} parent=47 // pred_fallthru
          _
        // Predicated region
        $region61: #{tpu_custom_call.1} parent=47 // pred_check
          %p347 = pneg %p123
        $region62: #{tpu_custom_call.1} parent=47 // pred_check_branch
          %349 = sbr.rel (%p347) target = $region64
        $region63: #{tpu_custom_call.1} parent=47 // pred_region
          %350 = dma.done [#allocation12], 256
        $region64: #{tpu_custom_call.1} parent=47 // pred_fallthru
          _
        // Predicated region
        $region65: #{tpu_custom_call.1} parent=47 // pred_check
          %p351 = pneg %p144
        $region66: #{tpu_custom_call.1} parent=47 // pred_check_branch
          %353 = sbr.rel (%p351) target = $region68
        $region67: #{tpu_custom_call.1} parent=47 // pred_region
          %354 = dma.done [#allocation12], 16
        $region68: #{tpu_custom_call.1} parent=47 // pred_fallthru
          _
        // Predicated region
        $region69: #{tpu_custom_call.1} parent=47 // pred_check
          %p355 = pneg %p165
        $region70: #{tpu_custom_call.1} parent=47 // pred_check_branch
          %357 = sbr.rel (%p355) target = $region72
        $region71: #{tpu_custom_call.1} parent=47 // pred_region
          %358 = dma.done [#allocation15], 256
        $region72: #{tpu_custom_call.1} parent=47 // pred_fallthru
          _
        // Predicated region
        $region73: #{tpu_custom_call.1} parent=47 // pred_check
          %p359 = pneg %p186
        $region74: #{tpu_custom_call.1} parent=47 // pred_check_branch
          %361 = sbr.rel (%p359) target = $region76
        $region75: #{tpu_custom_call.1} parent=47 // pred_region
          %362 = dma.done [#allocation15], 16
        $region76: #{tpu_custom_call.1} parent=47 // pred_fallthru
          _
        %s363 = sand.u32 %s47, 1
        %s364 = scalar_lea.sflag [#allocation6], %s363
        %s365 = sand.u32 %s47, 1
        %s366 = smul.addr %s365, 4
        %s367 = scalar_lea.vmem [#allocation5], %s366
        %p368 = pneg %p60
        %p369 = pneg %p57
        %p370 = pneg %p81
        %p371 = pneg %p78
        %p372 = pneg %p102
        %p373 = pneg %p99
        %p374 = pneg %p123
        %p375 = pneg %p120
        %p376 = pneg %p144
        %p377 = pneg %p141
        %p378 = pneg %p165
        %p379 = pneg %p162
        %p380 = pneg %p186
        %p381 = pneg %p183
        %p382 = pneg %p214
        %p383 = pneg %p211
        %s384 = sand.u32 %s201, 1
        %s385 = scalar_lea.sflag [#allocation7], %s384
        %s386 = sand.u32 %s201, 1
        %s387 = smul.addr %s386, 8
        %s388 = scalar_lea.vmem [#allocation17], %s387
        %p390 = scmp.eq.s32.totalorder %s32, 0
        // Predicated region
        $region77: #{tpu_custom_call.1} parent=47 // pred_check
          %p391 = pneg %p390
        $region78: #{tpu_custom_call.1} parent=47 // pred_check_branch
          %393 = sbr.rel (%p391) target = $region80
        $region79: #{tpu_custom_call.1} parent=47 // pred_region
          %v394 = vld [vmem:[%s334] sm:$0xf]
          %v395 = vld [vmem:[#allocation11] sm:$0xf]
          %v396 = vld [vmem:[#allocation11 + $0x4] sm:$0xf]
          %v397 = vld [vmem:[#allocation11 + $0x8] sm:$0xf]
          %v398 = vld [vmem:[#allocation11 + $0xc] sm:$0xf]
          %v399 = vld [vmem:[#allocation13] sm:$0x1]
          %v401 = vlaneseq
          %v402 = vshrl.u32 %v401, 7
          %v403 = vsub.s32 0, %v402
          %v404 = vrot.slane %v399, %v403
          %v410 = vunpack.c.l.b16 %v395
          %v411 = vunpack.c.l.b16 %v396
          %v412 = vunpack.c.l.b16 %v397
          %v413 = vunpack.c.l.b16 %v398
          %v414 = vpack.c.b16 %v411, %v410
          %v415 = vpack.c.b16 %v413, %v412
          %vm418 = vcmask 261120
          %v420 = vsel %vm418, %v394, 0
          %422 = vmatprep.subr.bf16.mxu0 0
          %423 = vmatpush1.bf16.msra.mxu0 %v414
          %424 = vmatprep.subr.bf16.mxu0 0
          %425 = vmatpush1.bf16.msra.mxu0 %v415
          %426 = vmatprep.subr.bf16.mxu0 0
          %427 = vmatpush1.bf16.msra.mxu0 0
          %428 = vmatprep.subr.bf16.mxu0 0
          %429 = vmatpush1.bf16.msra.mxu0 0
          %430 = vmatprep.subr.bf16.mxu0 0
          %431 = vmatpush1.bf16.msra.mxu0 0
          %432 = vmatprep.subr.bf16.mxu0 0
          %433 = vmatpush1.bf16.msra.mxu0 0
          %434 = vmatprep.subr.bf16.mxu0 0
          %435 = vmatpush1.bf16.msra.mxu0 0
          %436 = vmatprep.subr.bf16.mxu0 0
          %437 = vmatpush1.bf16.msra.mxu0 0
          %438 = vmatprep.subr.bf16.mxu0 0
          %439 = vmatpush1.bf16.msra.mxu0 0
          %440 = vmatprep.subr.bf16.mxu0 0
          %441 = vmatpush1.bf16.msra.mxu0 0
          %442 = vmatprep.subr.bf16.mxu0 0
          %443 = vmatpush1.bf16.msra.mxu0 0
          %444 = vmatprep.subr.bf16.mxu0 0
          %445 = vmatpush1.bf16.msra.mxu0 0
          %446 = vmatprep.subr.bf16.mxu0 0
          %447 = vmatpush1.bf16.msra.mxu0 0
          %448 = vmatprep.subr.bf16.mxu0 0
          %449 = vmatpush1.bf16.msra.mxu0 0
          %450 = vmatprep.subr.bf16.mxu0 0
          %451 = vmatpush1.bf16.msra.mxu0 0
          %452 = vmatprep.subr.bf16.mxu0 0
          %453 = vmatpush1.bf16.msra.mxu0 0
          %454 = vmatprep.mubr.bf16.mxu0 0
          %455 = vmatmul.mubr.bf16.gmra.mrb[0].mxu0 %v420
          %v456 = vpop.f32.mrb[0].mxu0
          %v457 = vadd.f32 %v404, %v456
          %v458 = vpop.f32.mrb[0].mxu0
          %v459 = vpop.f32.mrb[0].mxu0
          %v460 = vpop.f32.mrb[0].mxu0
          %461 = vdwg.mxu0
          %v462 = vpack.c.bf16 %v457, %v457
          %vm463 = vcmask 60416
          %464 = vst.msk [vmem:[#allocation2] sm:$0xf] %vm463, %v462
          %v466 = vunpack.c.l.b16 %v462
          %v467 = vpack.c.b16 %v466, %v466
          %468 = vrot.lane.b32.xlu0 %v467, 96
          %v469 = vpop.permute.xlu0 %468
          %471 = vst.msk [vmem:[#allocation3] sm:$0xf] %vm463, %v469
          %472 = vrot.lane.b32.xlu0 %v467, 120
          %v473 = vpop.permute.xlu0 %472
          %s475 = scalar_lea.vmem [#allocation2], 4
          %476 = vst.msk [vmem:[%s475] sm:$0xf] %vm463, %v473
          %477 = vrot.lane.b32.xlu0 %v467, 88
          %v478 = vpop.permute.xlu0 %477
          %s480 = scalar_lea.vmem [#allocation3], 4
          %481 = vst.msk [vmem:[%s480] sm:$0xf] %vm463, %v478
          %482 = vrot.lane.b32.xlu0 %v467, 112
          %v483 = vpop.permute.xlu0 %482
          %s485 = scalar_lea.vmem [#allocation2], 8
          %486 = vst.msk [vmem:[%s485] sm:$0xf] %vm463, %v483
          %487 = vrot.lane.b32.xlu0 %v467, 80
          %v488 = vpop.permute.xlu0 %487
          %s490 = scalar_lea.vmem [#allocation3], 8
          %491 = vst.msk [vmem:[%s490] sm:$0xf] %vm463, %v488
          %492 = vrot.lane.b32.xlu0 %v467, 104
          %v493 = vpop.permute.xlu0 %492
          %s495 = scalar_lea.vmem [#allocation2], 12
          %496 = vst.msk [vmem:[%s495] sm:$0xf] %vm463, %v493
          %497 = vrot.lane.b32.xlu0 %v467, 72
          %v498 = vpop.permute.xlu0 %497
          %s500 = scalar_lea.vmem [#allocation3], 12
          %501 = vst.msk [vmem:[%s500] sm:$0xf] %vm463, %v498
        $region80: #{tpu_custom_call.1} parent=47 // pred_fallthru
          _
        %s502 = smul.u32 %s32, 8
        %s503 = sshra.s32 %s502, 3
        %s504 = sand.u32 %s502, 7
        %s505 = smul.addr %s503, 4
        %s506 = scalar_lea.vmem %s334, %s505 [#allocation5]
        %v507 = vld [vmem:[%s506] sm:$0xf]
        %v508 = vld [vmem:[#allocation8] sm:$0xf]
        %v509 = vld [vmem:[#allocation8 + $0x4] sm:$0xf]
        %v510 = vld [vmem:[#allocation8 + $0x8] sm:$0xf]
        %v511 = vld [vmem:[#allocation8 + $0xc] sm:$0xf]
        %v512 = vld [vmem:[#allocation10] sm:$0x1]
        %v514 = vlaneseq
        %v515 = vshrl.u32 %v514, 7
        %v516 = vsub.s32 0, %v515
        %v517 = vrot.slane %v512, %v516
        %v523 = vunpack.c.l.b16 %v508
        %v524 = vunpack.c.l.b16 %v509
        %v525 = vunpack.c.l.b16 %v510
        %v526 = vunpack.c.l.b16 %v511
        %v527 = vpack.c.b16 %v524, %v523
        %v528 = vpack.c.b16 %v526, %v525
        %vm531 = vcmask 261120
        %v533 = vsel %vm531, %v507, 0
        %535 = vmatprep.subr.bf16.mxu0 0
        %536 = vmatpush1.bf16.msra.mxu0 %v527
        %537 = vmatprep.subr.bf16.mxu0 0
        %538 = vmatpush1.bf16.msra.mxu0 %v528
        %539 = vmatprep.subr.bf16.mxu0 0
        %540 = vmatpush1.bf16.msra.mxu0 0
        %541 = vmatprep.subr.bf16.mxu0 0
        %542 = vmatpush1.bf16.msra.mxu0 0
        %543 = vmatprep.subr.bf16.mxu0 0
        %544 = vmatpush1.bf16.msra.mxu0 0
        %545 = vmatprep.subr.bf16.mxu0 0
        %546 = vmatpush1.bf16.msra.mxu0 0
        %547 = vmatprep.subr.bf16.mxu0 0
        %548 = vmatpush1.bf16.msra.mxu0 0
        %549 = vmatprep.subr.bf16.mxu0 0
        %550 = vmatpush1.bf16.msra.mxu0 0
        %551 = vmatprep.subr.bf16.mxu0 0
        %552 = vmatpush1.bf16.msra.mxu0 0
        %553 = vmatprep.subr.bf16.mxu0 0
        %554 = vmatpush1.bf16.msra.mxu0 0
        %555 = vmatprep.subr.bf16.mxu0 0
        %556 = vmatpush1.bf16.msra.mxu0 0
        %557 = vmatprep.subr.bf16.mxu0 0
        %558 = vmatpush1.bf16.msra.mxu0 0
        %559 = vmatprep.subr.bf16.mxu0 0
        %560 = vmatpush1.bf16.msra.mxu0 0
        %561 = vmatprep.subr.bf16.mxu0 0
        %562 = vmatpush1.bf16.msra.mxu0 0
        %563 = vmatprep.subr.bf16.mxu0 0
        %564 = vmatpush1.bf16.msra.mxu0 0
        %565 = vmatprep.subr.bf16.mxu0 0
        %566 = vmatpush1.bf16.msra.mxu0 0
        %567 = vmatprep.mubr.bf16.mxu0 0
        %568 = vmatmul.mubr.bf16.gmra.mrb[0].mxu0 %v533
        %v569 = vpop.f32.mrb[0].mxu0
        %v570 = vadd.f32 %v517, %v569
        %v571 = vpop.f32.mrb[0].mxu0
        %v572 = vpop.f32.mrb[0].mxu0
        %v573 = vpop.f32.mrb[0].mxu0
        %574 = vdwg.mxu0
        %v575 = vpack.c.bf16 %v570, %v570
        %vm576 = vcmask 60416
        %577 = vst.msk [vmem:[#allocation4] sm:$0xf] %vm576, %v575
        %v579 = vunpack.c.l.b16 %v575
        %v580 = vpack.c.b16 %v579, %v579
        %581 = vrot.lane.b32.xlu0 %v580, 120
        %v582 = vpop.permute.xlu0 %581
        %s584 = scalar_lea.vmem [#allocation4], 4
        %585 = vst.msk [vmem:[%s584] sm:$0xf] %vm576, %v582
        %586 = vrot.lane.b32.xlu0 %v580, 112
        %v587 = vpop.permute.xlu0 %586
        %s589 = scalar_lea.vmem [#allocation4], 8
        %590 = vst.msk [vmem:[%s589] sm:$0xf] %vm576, %v587
        %591 = vrot.lane.b32.xlu0 %v580, 104
        %v592 = vpop.permute.xlu0 %591
        %s594 = scalar_lea.vmem [#allocation4], 12
        %595 = vst.msk [vmem:[%s594] sm:$0xf] %vm576, %v592
        %v596 = vld [vmem:[#allocation4] sm:$0xf]
        %v597 = vld [vmem:[#allocation4 + $0x4] sm:$0xf]
        %v598 = vld [vmem:[#allocation4 + $0x8] sm:$0xf]
        %v599 = vld [vmem:[#allocation4 + $0xc] sm:$0xf]
        %v600 = vld [vmem:[#allocation2] sm:$0xf]
        %v601 = vld [vmem:[#allocation2 + $0x4] sm:$0xf]
        %v602 = vld [vmem:[#allocation2 + $0x8] sm:$0xf]
        %v603 = vld [vmem:[#allocation2 + $0xc] sm:$0xf]
        %v604 = vld [vmem:[#allocation3] sm:$0xf]
        %v605 = vld [vmem:[#allocation3 + $0x4] sm:$0xf]
        %v606 = vld [vmem:[#allocation3 + $0x8] sm:$0xf]
        %v607 = vld [vmem:[#allocation3 + $0xc] sm:$0xf]
        %vm608 = vcmask 64512
        %v610 = vsel %vm608, %v596, 0
        %v613 = vsel %vm608, %v600, 0
        %615 = vmatprep.subr.bf16.mxu0 0
        %616 = vmatpush1.bf16.xpose.msra.mxu0 %v613
        %617 = vmatprep.subr.bf16.mxu0 0
        %618 = vmatpush1.bf16.xpose.msra.mxu0 0
        %619 = vmatprep.subr.bf16.mxu0 0
        %620 = vmatpush1.bf16.xpose.msra.mxu0 0
        %621 = vmatprep.subr.bf16.mxu0 0
        %622 = vmatpush1.bf16.xpose.msra.mxu0 0
        %623 = vmatprep.subr.bf16.mxu0 0
        %624 = vmatpush1.bf16.xpose.msra.mxu0 0
        %625 = vmatprep.subr.bf16.mxu0 0
        %626 = vmatpush1.bf16.xpose.msra.mxu0 0
        %627 = vmatprep.subr.bf16.mxu0 0
        %628 = vmatpush1.bf16.xpose.msra.mxu0 0
        %629 = vmatprep.subr.bf16.mxu0 0
        %630 = vmatpush1.bf16.xpose.msra.mxu0 0
        %631 = vmatprep.subr.bf16.mxu0 0
        %632 = vmatpush1.bf16.xpose.msra.mxu0 0
        %633 = vmatprep.subr.bf16.mxu0 0
        %634 = vmatpush1.bf16.xpose.msra.mxu0 0
        %635 = vmatprep.subr.bf16.mxu0 0
        %636 = vmatpush1.bf16.xpose.msra.mxu0 0
        %637 = vmatprep.subr.bf16.mxu0 0
        %638 = vmatpush1.bf16.xpose.msra.mxu0 0
        %639 = vmatprep.subr.bf16.mxu0 0
        %640 = vmatpush1.bf16.xpose.msra.mxu0 0
        %641 = vmatprep.subr.bf16.mxu0 0
        %642 = vmatpush1.bf16.xpose.msra.mxu0 0
        %643 = vmatprep.subr.bf16.mxu0 0
        %644 = vmatpush1.bf16.xpose.msra.mxu0 0
        %645 = vmatprep.subr.bf16.mxu0 0
        %646 = vmatpush1.bf16.xpose.msra.mxu0 0
        %647 = vmatprep.mubr.bf16.mxu0 0
        %648 = vmatmul.mubr.bf16.gmra.mrb[0].mxu0 %v610
        %v649 = vpop.f32.mrb[0].mxu0
        %v650 = vadd.f32 0.0, %v649
        %v651 = vpop.f32.mrb[0].mxu0
        %v652 = vpop.f32.mrb[0].mxu0
        %v653 = vpop.f32.mrb[0].mxu0
        %654 = vdwg.mxu0
        %v656 = vsel %vm608, %v597, 0
        %v659 = vsel %vm608, %v601, 0
        %661 = vmatprep.subr.bf16.mxu0 0
        %662 = vmatpush1.bf16.xpose.msra.mxu0 %v659
        %663 = vmatprep.subr.bf16.mxu0 0
        %664 = vmatpush1.bf16.xpose.msra.mxu0 0
        %665 = vmatprep.subr.bf16.mxu0 0
        %666 = vmatpush1.bf16.xpose.msra.mxu0 0
        %667 = vmatprep.subr.bf16.mxu0 0
        %668 = vmatpush1.bf16.xpose.msra.mxu0 0
        %669 = vmatprep.subr.bf16.mxu0 0
        %670 = vmatpush1.bf16.xpose.msra.mxu0 0
        %671 = vmatprep.subr.bf16.mxu0 0
        %672 = vmatpush1.bf16.xpose.msra.mxu0 0
        %673 = vmatprep.subr.bf16.mxu0 0
        %674 = vmatpush1.bf16.xpose.msra.mxu0 0
        %675 = vmatprep.subr.bf16.mxu0 0
        %676 = vmatpush1.bf16.xpose.msra.mxu0 0
        %677 = vmatprep.subr.bf16.mxu0 0
        %678 = vmatpush1.bf16.xpose.msra.mxu0 0
        %679 = vmatprep.subr.bf16.mxu0 0
        %680 = vmatpush1.bf16.xpose.msra.mxu0 0
        %681 = vmatprep.subr.bf16.mxu0 0
        %682 = vmatpush1.bf16.xpose.msra.mxu0 0
        %683 = vmatprep.subr.bf16.mxu0 0
        %684 = vmatpush1.bf16.xpose.msra.mxu0 0
        %685 = vmatprep.subr.bf16.mxu0 0
        %686 = vmatpush1.bf16.xpose.msra.mxu0 0
        %687 = vmatprep.subr.bf16.mxu0 0
        %688 = vmatpush1.bf16.xpose.msra.mxu0 0
        %689 = vmatprep.subr.bf16.mxu0 0
        %690 = vmatpush1.bf16.xpose.msra.mxu0 0
        %691 = vmatprep.subr.bf16.mxu0 0
        %692 = vmatpush1.bf16.xpose.msra.mxu0 0
        %693 = vmatprep.mubr.bf16.mxu0 0
        %694 = vmatmul.mubr.bf16.gmra.mrb[0].mxu0 %v656
        %v695 = vpop.f32.mrb[0].mxu0
        %v696 = vadd.f32 0.0, %v695
        %v697 = vpop.f32.mrb[0].mxu0
        %v698 = vpop.f32.mrb[0].mxu0
        %v699 = vpop.f32.mrb[0].mxu0
        %700 = vdwg.mxu0
        %v702 = vsel %vm608, %v598, 0
        %v705 = vsel %vm608, %v602, 0
        %707 = vmatprep.subr.bf16.mxu0 0
        %708 = vmatpush1.bf16.xpose.msra.mxu0 %v705
        %709 = vmatprep.subr.bf16.mxu0 0
        %710 = vmatpush1.bf16.xpose.msra.mxu0 0
        %711 = vmatprep.subr.bf16.mxu0 0
        %712 = vmatpush1.bf16.xpose.msra.mxu0 0
        %713 = vmatprep.subr.bf16.mxu0 0
        %714 = vmatpush1.bf16.xpose.msra.mxu0 0
        %715 = vmatprep.subr.bf16.mxu0 0
        %716 = vmatpush1.bf16.xpose.msra.mxu0 0
        %717 = vmatprep.subr.bf16.mxu0 0
        %718 = vmatpush1.bf16.xpose.msra.mxu0 0
        %719 = vmatprep.subr.bf16.mxu0 0
        %720 = vmatpush1.bf16.xpose.msra.mxu0 0
        %721 = vmatprep.subr.bf16.mxu0 0
        %722 = vmatpush1.bf16.xpose.msra.mxu0 0
        %723 = vmatprep.subr.bf16.mxu0 0
        %724 = vmatpush1.bf16.xpose.msra.mxu0 0
        %725 = vmatprep.subr.bf16.mxu0 0
        %726 = vmatpush1.bf16.xpose.msra.mxu0 0
        %727 = vmatprep.subr.bf16.mxu0 0
        %728 = vmatpush1.bf16.xpose.msra.mxu0 0
        %729 = vmatprep.subr.bf16.mxu0 0
        %730 = vmatpush1.bf16.xpose.msra.mxu0 0
        %731 = vmatprep.subr.bf16.mxu0 0
        %732 = vmatpush1.bf16.xpose.msra.mxu0 0
        %733 = vmatprep.subr.bf16.mxu0 0
        %734 = vmatpush1.bf16.xpose.msra.mxu0 0
        %735 = vmatprep.subr.bf16.mxu0 0
        %736 = vmatpush1.bf16.xpose.msra.mxu0 0
        %737 = vmatprep.subr.bf16.mxu0 0
        %738 = vmatpush1.bf16.xpose.msra.mxu0 0
        %739 = vmatprep.mubr.bf16.mxu0 0
        %740 = vmatmul.mubr.bf16.gmra.mrb[0].mxu0 %v702
        %v741 = vpop.f32.mrb[0].mxu0
        %v742 = vadd.f32 0.0, %v741
        %v743 = vpop.f32.mrb[0].mxu0
        %v744 = vpop.f32.mrb[0].mxu0
        %v745 = vpop.f32.mrb[0].mxu0
        %746 = vdwg.mxu0
        %v748 = vsel %vm608, %v599, 0
        %v751 = vsel %vm608, %v603, 0
        %753 = vmatprep.subr.bf16.mxu0 0
        %754 = vmatpush1.bf16.xpose.msra.mxu0 %v751
        %755 = vmatprep.subr.bf16.mxu0 0
        %756 = vmatpush1.bf16.xpose.msra.mxu0 0
        %757 = vmatprep.subr.bf16.mxu0 0
        %758 = vmatpush1.bf16.xpose.msra.mxu0 0
        %759 = vmatprep.subr.bf16.mxu0 0
        %760 = vmatpush1.bf16.xpose.msra.mxu0 0
        %761 = vmatprep.subr.bf16.mxu0 0
        %762 = vmatpush1.bf16.xpose.msra.mxu0 0
        %763 = vmatprep.subr.bf16.mxu0 0
        %764 = vmatpush1.bf16.xpose.msra.mxu0 0
        %765 = vmatprep.subr.bf16.mxu0 0
        %766 = vmatpush1.bf16.xpose.msra.mxu0 0
        %767 = vmatprep.subr.bf16.mxu0 0
        %768 = vmatpush1.bf16.xpose.msra.mxu0 0
        %769 = vmatprep.subr.bf16.mxu0 0
        %770 = vmatpush1.bf16.xpose.msra.mxu0 0
        %771 = vmatprep.subr.bf16.mxu0 0
        %772 = vmatpush1.bf16.xpose.msra.mxu0 0
        %773 = vmatprep.subr.bf16.mxu0 0
        %774 = vmatpush1.bf16.xpose.msra.mxu0 0
        %775 = vmatprep.subr.bf16.mxu0 0
        %776 = vmatpush1.bf16.xpose.msra.mxu0 0
        %777 = vmatprep.subr.bf16.mxu0 0
        %778 = vmatpush1.bf16.xpose.msra.mxu0 0
        %779 = vmatprep.subr.bf16.mxu0 0
        %780 = vmatpush1.bf16.xpose.msra.mxu0 0
        %781 = vmatprep.subr.bf16.mxu0 0
        %782 = vmatpush1.bf16.xpose.msra.mxu0 0
        %783 = vmatprep.subr.bf16.mxu0 0
        %784 = vmatpush1.bf16.xpose.msra.mxu0 0
        %785 = vmatprep.mubr.bf16.mxu0 0
        %786 = vmatmul.mubr.bf16.gmra.mrb[0].mxu0 %v748
        %v787 = vpop.f32.mrb[0].mxu0
        %v788 = vadd.f32 0.0, %v787
        %v789 = vpop.f32.mrb[0].mxu0
        %v790 = vpop.f32.mrb[0].mxu0
        %v791 = vpop.f32.mrb[0].mxu0
        %792 = vdwg.mxu0
        %v793 = vsel %vm608, %v650, -inf
        %794 = vmax.xlane.f32.xlu0 %v793
        %v795 = vpop.xlane.xlu0 %794
        %v796 = vsel %vm608, %v696, -inf
        %797 = vmax.xlane.f32.xlu0 %v796
        %v798 = vpop.xlane.xlu0 %797
        %v799 = vsel %vm608, %v742, -inf
        %800 = vmax.xlane.f32.xlu0 %v799
        %v801 = vpop.xlane.xlu0 %800
        %v802 = vsel %vm608, %v788, -inf
        %803 = vmax.xlane.f32.xlu0 %v802
        %v804 = vpop.xlane.xlu0 %803
        %v805 = vsub.f32 %v650, %v795
        %v806 = vsub.f32 %v696, %v798
        %v807 = vsub.f32 %v742, %v801
        %v808 = vsub.f32 %v788, %v804
        %v809 = vmul.f32 %v805, 1.442695
        %v810 = vpow.pop %v809
        %v811 = vmul.f32 %v806, 1.442695
        %v812 = vpow.pop %v811
        %v813 = vmul.f32 %v807, 1.442695
        %v814 = vpow.pop %v813
        %v815 = vmul.f32 %v808, 1.442695
        %v816 = vpow.pop %v815
        %v817 = vsel %vm608, %v810, 0.0
        %818 = vadd.xlane.f32.xlu0 %v817
        %v819 = vpop.xlane.xlu0 %818
        %v820 = vsel %vm608, %v812, 0.0
        %821 = vadd.xlane.f32.xlu0 %v820
        %v822 = vpop.xlane.xlu0 %821
        %v823 = vsel %vm608, %v814, 0.0
        %824 = vadd.xlane.f32.xlu0 %v823
        %v825 = vpop.xlane.xlu0 %824
        %v826 = vsel %vm608, %v816, 0.0
        %827 = vadd.xlane.f32.xlu0 %v826
        %v828 = vpop.xlane.xlu0 %827
        %v829 = vrcp.pop %v819
        %v830 = vrcp.pop %v822
        %v831 = vrcp.pop %v825
        %v832 = vrcp.pop %v828
        %v833 = vmul.f32 %v810, %v829
        %v834 = vmul.f32 %v812, %v830
        %v835 = vmul.f32 %v814, %v831
        %v836 = vmul.f32 %v816, %v832
        %v837 = vpack.c.bf16 %v833, %v833
        %v838 = vpack.c.bf16 %v834, %v834
        %v839 = vpack.c.bf16 %v835, %v835
        %v840 = vpack.c.bf16 %v836, %v836
        %v842 = vsel %vm608, %v837, 0
        %vm844 = vcmask 1043456
        %v846 = vsel %vm844, %v604, 0
        %848 = vmatprep.subr.bf16.mxu0 0
        %849 = vmatpush1.bf16.msra.mxu0 %v846
        %850 = vmatprep.subr.bf16.mxu0 0
        %851 = vmatpush1.bf16.msra.mxu0 0
        %852 = vmatprep.subr.bf16.mxu0 0
        %853 = vmatpush1.bf16.msra.mxu0 0
        %854 = vmatprep.subr.bf16.mxu0 0
        %855 = vmatpush1.bf16.msra.mxu0 0
        %856 = vmatprep.subr.bf16.mxu0 0
        %857 = vmatpush1.bf16.msra.mxu0 0
        %858 = vmatprep.subr.bf16.mxu0 0
        %859 = vmatpush1.bf16.msra.mxu0 0
        %860 = vmatprep.subr.bf16.mxu0 0
        %861 = vmatpush1.bf16.msra.mxu0 0
        %862 = vmatprep.subr.bf16.mxu0 0
        %863 = vmatpush1.bf16.msra.mxu0 0
        %864 = vmatprep.subr.bf16.mxu0 0
        %865 = vmatpush1.bf16.msra.mxu0 0
        %866 = vmatprep.subr.bf16.mxu0 0
        %867 = vmatpush1.bf16.msra.mxu0 0
        %868 = vmatprep.subr.bf16.mxu0 0
        %869 = vmatpush1.bf16.msra.mxu0 0
        %870 = vmatprep.subr.bf16.mxu0 0
        %871 = vmatpush1.bf16.msra.mxu0 0
        %872 = vmatprep.subr.bf16.mxu0 0
        %873 = vmatpush1.bf16.msra.mxu0 0
        %874 = vmatprep.subr.bf16.mxu0 0
        %875 = vmatpush1.bf16.msra.mxu0 0
        %876 = vmatprep.subr.bf16.mxu0 0
        %877 = vmatpush1.bf16.msra.mxu0 0
        %878 = vmatprep.subr.bf16.mxu0 0
        %879 = vmatpush1.bf16.msra.mxu0 0
        %880 = vmatprep.mubr.bf16.mxu0 0
        %881 = vmatmul.mubr.bf16.gmra.mrb[0].mxu0 %v842
        %v882 = vpop.f32.mrb[0].mxu0
        %v883 = vadd.f32 0.0, %v882
        %v884 = vpop.f32.mrb[0].mxu0
        %v885 = vpop.f32.mrb[0].mxu0
        %v886 = vpop.f32.mrb[0].mxu0
        %887 = vdwg.mxu0
        %v889 = vsel %vm608, %v838, 0
        %v892 = vsel %vm844, %v605, 0
        %894 = vmatprep.subr.bf16.mxu0 0
        %895 = vmatpush1.bf16.msra.mxu0 %v892
        %896 = vmatprep.subr.bf16.mxu0 0
        %897 = vmatpush1.bf16.msra.mxu0 0
        %898 = vmatprep.subr.bf16.mxu0 0
        %899 = vmatpush1.bf16.msra.mxu0 0
        %900 = vmatprep.subr.bf16.mxu0 0
        %901 = vmatpush1.bf16.msra.mxu0 0
        %902 = vmatprep.subr.bf16.mxu0 0
        %903 = vmatpush1.bf16.msra.mxu0 0
        %904 = vmatprep.subr.bf16.mxu0 0
        %905 = vmatpush1.bf16.msra.mxu0 0
        %906 = vmatprep.subr.bf16.mxu0 0
        %907 = vmatpush1.bf16.msra.mxu0 0
        %908 = vmatprep.subr.bf16.mxu0 0
        %909 = vmatpush1.bf16.msra.mxu0 0
        %910 = vmatprep.subr.bf16.mxu0 0
        %911 = vmatpush1.bf16.msra.mxu0 0
        %912 = vmatprep.subr.bf16.mxu0 0
        %913 = vmatpush1.bf16.msra.mxu0 0
        %914 = vmatprep.subr.bf16.mxu0 0
        %915 = vmatpush1.bf16.msra.mxu0 0
        %916 = vmatprep.subr.bf16.mxu0 0
        %917 = vmatpush1.bf16.msra.mxu0 0
        %918 = vmatprep.subr.bf16.mxu0 0
        %919 = vmatpush1.bf16.msra.mxu0 0
        %920 = vmatprep.subr.bf16.mxu0 0
        %921 = vmatpush1.bf16.msra.mxu0 0
        %922 = vmatprep.subr.bf16.mxu0 0
        %923 = vmatpush1.bf16.msra.mxu0 0
        %924 = vmatprep.subr.bf16.mxu0 0
        %925 = vmatpush1.bf16.msra.mxu0 0
        %926 = vmatprep.mubr.bf16.mxu0 0
        %927 = vmatmul.mubr.bf16.gmra.mrb[0].mxu0 %v889
        %v928 = vpop.f32.mrb[0].mxu0
        %v929 = vadd.f32 0.0, %v928
        %v930 = vpop.f32.mrb[0].mxu0
        %v931 = vpop.f32.mrb[0].mxu0
        %v932 = vpop.f32.mrb[0].mxu0
        %933 = vdwg.mxu0
        %v935 = vsel %vm608, %v839, 0
        %v938 = vsel %vm844, %v606, 0
        %940 = vmatprep.subr.bf16.mxu0 0
        %941 = vmatpush1.bf16.msra.mxu0 %v938
        %942 = vmatprep.subr.bf16.mxu0 0
        %943 = vmatpush1.bf16.msra.mxu0 0
        %944 = vmatprep.subr.bf16.mxu0 0
        %945 = vmatpush1.bf16.msra.mxu0 0
        %946 = vmatprep.subr.bf16.mxu0 0
        %947 = vmatpush1.bf16.msra.mxu0 0
        %948 = vmatprep.subr.bf16.mxu0 0
        %949 = vmatpush1.bf16.msra.mxu0 0
        %950 = vmatprep.subr.bf16.mxu0 0
        %951 = vmatpush1.bf16.msra.mxu0 0
        %952 = vmatprep.subr.bf16.mxu0 0
        %953 = vmatpush1.bf16.msra.mxu0 0
        %954 = vmatprep.subr.bf16.mxu0 0
        %955 = vmatpush1.bf16.msra.mxu0 0
        %956 = vmatprep.subr.bf16.mxu0 0
        %957 = vmatpush1.bf16.msra.mxu0 0
        %958 = vmatprep.subr.bf16.mxu0 0
        %959 = vmatpush1.bf16.msra.mxu0 0
        %960 = vmatprep.subr.bf16.mxu0 0
        %961 = vmatpush1.bf16.msra.mxu0 0
        %962 = vmatprep.subr.bf16.mxu0 0
        %963 = vmatpush1.bf16.msra.mxu0 0
        %964 = vmatprep.subr.bf16.mxu0 0
        %965 = vmatpush1.bf16.msra.mxu0 0
        %966 = vmatprep.subr.bf16.mxu0 0
        %967 = vmatpush1.bf16.msra.mxu0 0
        %968 = vmatprep.subr.bf16.mxu0 0
        %969 = vmatpush1.bf16.msra.mxu0 0
        %970 = vmatprep.subr.bf16.mxu0 0
        %971 = vmatpush1.bf16.msra.mxu0 0
        %972 = vmatprep.mubr.bf16.mxu0 0
        %973 = vmatmul.mubr.bf16.gmra.mrb[0].mxu0 %v935
        %v974 = vpop.f32.mrb[0].mxu0
        %v975 = vadd.f32 0.0, %v974
        %v976 = vpop.f32.mrb[0].mxu0
        %v977 = vpop.f32.mrb[0].mxu0
        %v978 = vpop.f32.mrb[0].mxu0
        %979 = vdwg.mxu0
        %v981 = vsel %vm608, %v840, 0
        %v984 = vsel %vm844, %v607, 0
        %986 = vmatprep.subr.bf16.mxu0 0
        %987 = vmatpush1.bf16.msra.mxu0 %v984
        %988 = vmatprep.subr.bf16.mxu0 0
        %989 = vmatpush1.bf16.msra.mxu0 0
        %990 = vmatprep.subr.bf16.mxu0 0
        %991 = vmatpush1.bf16.msra.mxu0 0
        %992 = vmatprep.subr.bf16.mxu0 0
        %993 = vmatpush1.bf16.msra.mxu0 0
        %994 = vmatprep.subr.bf16.mxu0 0
        %995 = vmatpush1.bf16.msra.mxu0 0
        %996 = vmatprep.subr.bf16.mxu0 0
        %997 = vmatpush1.bf16.msra.mxu0 0
        %998 = vmatprep.subr.bf16.mxu0 0
        %999 = vmatpush1.bf16.msra.mxu0 0
        %1000 = vmatprep.subr.bf16.mxu0 0
        %1001 = vmatpush1.bf16.msra.mxu0 0
        %1002 = vmatprep.subr.bf16.mxu0 0
        %1003 = vmatpush1.bf16.msra.mxu0 0
        %1004 = vmatprep.subr.bf16.mxu0 0
        %1005 = vmatpush1.bf16.msra.mxu0 0
        %1006 = vmatprep.subr.bf16.mxu0 0
        %1007 = vmatpush1.bf16.msra.mxu0 0
        %1008 = vmatprep.subr.bf16.mxu0 0
        %1009 = vmatpush1.bf16.msra.mxu0 0
        %1010 = vmatprep.subr.bf16.mxu0 0
        %1011 = vmatpush1.bf16.msra.mxu0 0
        %1012 = vmatprep.subr.bf16.mxu0 0
        %1013 = vmatpush1.bf16.msra.mxu0 0
        %1014 = vmatprep.subr.bf16.mxu0 0
        %1015 = vmatpush1.bf16.msra.mxu0 0
        %1016 = vmatprep.subr.bf16.mxu0 0
        %1017 = vmatpush1.bf16.msra.mxu0 0
        %1018 = vmatprep.mubr.bf16.mxu0 0
        %1019 = vmatmul.mubr.bf16.gmra.mrb[0].mxu0 %v981
        %v1020 = vpop.f32.mrb[0].mxu0
        %v1021 = vadd.f32 0.0, %v1020
        %v1022 = vpop.f32.mrb[0].mxu0
        %v1023 = vpop.f32.mrb[0].mxu0
        %v1024 = vpop.f32.mrb[0].mxu0
        %1025 = vdwg.mxu0
        %1027 = vrot.lane.b32.xlu0 %v929, 8
        %v1028 = vpop.permute.xlu0 %1027
        %1031 = vrot.lane.b32.xlu0 %v975, 16
        %v1032 = vpop.permute.xlu0 %1031
        %1035 = vrot.lane.b32.xlu0 %v1021, 24
        %v1036 = vpop.permute.xlu0 %1035
        %v1038 = vsel %vm608, %v883, %v1028
        %vm1039 = vcmask 130048
        %v1040 = vsel %vm1039, %v1038, %v1032
        %vm1041 = vcmask 195584
        %v1042 = vsel %vm1041, %v1040, %v1036
        %v1043 = vpack.c.bf16 %v1042, %v1042
        %v1044 = vld [vmem:[#allocation14] sm:$0xf]
        %v1045 = vld [vmem:[#allocation14 + $0x4] sm:$0xf]
        %v1046 = vld [vmem:[#allocation14 + $0x8] sm:$0xf]
        %v1047 = vld [vmem:[#allocation14 + $0xc] sm:$0xf]
        %v1048 = vld [vmem:[#allocation16] sm:$0x1]
        %v1050 = vlaneseq
        %v1051 = vshrl.u32 %v1050, 7
        %v1052 = vsub.s32 0, %v1051
        %v1053 = vrot.slane %v1048, %v1052
        %v1059 = vunpack.c.l.b16 %v1044
        %v1060 = vunpack.c.l.b16 %v1045
        %v1061 = vunpack.c.l.b16 %v1046
        %v1062 = vunpack.c.l.b16 %v1047
        %v1063 = vpack.c.b16 %v1060, %v1059
        %v1064 = vpack.c.b16 %v1062, %v1061
        %v1068 = vsel %vm531, %v1043, 0
        %1070 = vmatprep.subr.bf16.mxu0 0
        %1071 = vmatpush1.bf16.msra.mxu0 %v1063
        %1072 = vmatprep.subr.bf16.mxu0 0
        %1073 = vmatpush1.bf16.msra.mxu0 %v1064
        %1074 = vmatprep.subr.bf16.mxu0 0
        %1075 = vmatpush1.bf16.msra.mxu0 0
        %1076 = vmatprep.subr.bf16.mxu0 0
        %1077 = vmatpush1.bf16.msra.mxu0 0
        %1078 = vmatprep.subr.bf16.mxu0 0
        %1079 = vmatpush1.bf16.msra.mxu0 0
        %1080 = vmatprep.subr.bf16.mxu0 0
        %1081 = vmatpush1.bf16.msra.mxu0 0
        %1082 = vmatprep.subr.bf16.mxu0 0
        %1083 = vmatpush1.bf16.msra.mxu0 0
        %1084 = vmatprep.subr.bf16.mxu0 0
        %1085 = vmatpush1.bf16.msra.mxu0 0
        %1086 = vmatprep.subr.bf16.mxu0 0
        %1087 = vmatpush1.bf16.msra.mxu0 0
        %1088 = vmatprep.subr.bf16.mxu0 0
        %1089 = vmatpush1.bf16.msra.mxu0 0
        %1090 = vmatprep.subr.bf16.mxu0 0
        %1091 = vmatpush1.bf16.msra.mxu0 0
        %1092 = vmatprep.subr.bf16.mxu0 0
        %1093 = vmatpush1.bf16.msra.mxu0 0
        %1094 = vmatprep.subr.bf16.mxu0 0
        %1095 = vmatpush1.bf16.msra.mxu0 0
        %1096 = vmatprep.subr.bf16.mxu0 0
        %1097 = vmatpush1.bf16.msra.mxu0 0
        %1098 = vmatprep.subr.bf16.mxu0 0
        %1099 = vmatpush1.bf16.msra.mxu0 0
        %1100 = vmatprep.subr.bf16.mxu0 0
        %1101 = vmatpush1.bf16.msra.mxu0 0
        %1102 = vmatprep.mubr.bf16.mxu0 0
        %1103 = vmatmul.mubr.bf16.gmra.mrb[0].mxu0 %v1068
        %v1104 = vpop.f32.mrb[0].mxu0
        %v1105 = vadd.f32 %v1053, %v1104
        %v1106 = vpop.f32.mrb[0].mxu0
        %v1107 = vpop.f32.mrb[0].mxu0
        %v1108 = vpop.f32.mrb[0].mxu0
        %1109 = vdwg.mxu0
        %1110 = vst.msk [vmem:[%s388] sm:$0xff] %vm531, %v1105
        %s1111 = sand.u32 %s201, 1
        %s1112 = scalar_lea.sflag [#allocation7], %s1111
        %s1113 = sand.u32 %s201, 1
        %s1114 = smul.addr %s1113, 8
        %s1115 = scalar_lea.vmem [#allocation17], %s1114
        // Predicated region
        $region81: #{tpu_custom_call.1} parent=47 // pred_check
          %p1116 = pneg %p211
        $region82: #{tpu_custom_call.1} parent=47 // pred_check_branch
          %1118 = sbr.rel (%p1116) target = $region84
        $region83: #{tpu_custom_call.1} parent=47 // pred_region
          %s1120 = ssub.s32 128, 128
          %1121 = vsyncadd %s1112, %s1120
          %s1122 = sadd.s32 %s32, %s31
          %s1123 = smul.addr %s1122, 128
          %s1124 = scalar_lea.hbm %s7, %s1123
          %s1126 = sshll.u32 %s1115, 4
          %s1127 = int_to_ptr.vmem [resolvable:$true] %s1126
          %1129 = dma.vmem_to_hbm [thread:$0]  %s1127, 128, %s1124, %s1112
        $region84: #{tpu_custom_call.1} parent=47 // pred_fallthru
          _
      $region48: #{tpu_custom_call.1} parent=5 // pred_fallthru
        _
      %p1130 = scmp.le.s32.totalorder 2, %s22
      // Predicated region
      $region85: #{tpu_custom_call.1} parent=5 // pred_check
        %p1131 = pneg %p1130
      $region86: #{tpu_custom_call.1} parent=5 // pred_check_branch
        %1133 = sbr.rel (%p1131) target = $region88
      $region87: #{tpu_custom_call.1} parent=5 // pred_region
        %s1134 = ssub.s32 %s22, 2
        // Predicated region
        $region89: #{tpu_custom_call.1} parent=87 // pred_check
          %p1135 = pneg %p217
        $region90: #{tpu_custom_call.1} parent=87 // pred_check_branch
          %1137 = sbr.rel (%p1135) target = $region92
        $region91: #{tpu_custom_call.1} parent=87 // pred_region
          %s1138 = sand.u32 %s202, 1
          %s1139 = scalar_lea.sflag [#allocation7], %s1138
          %s1140 = sand.u32 %s202, 1
          %s1141 = smul.addr %s1140, 8
          %s1142 = scalar_lea.vmem [#allocation17], %s1141
          %1143 = dma.done %s1139, 128
        $region92: #{tpu_custom_call.1} parent=87 // pred_fallthru
          _
      $region88: #{tpu_custom_call.1} parent=5 // pred_fallthru
        _
    $region6: #{tpu_custom_call.1} parent=1 // loop_footer
      %s26 = sadd.s32 1, %s22
    $region7: #{tpu_custom_call.1} parent=1 // loop_footer_branch
      %21 = sbr.rel target = $region3
    $region8: #{tpu_custom_call.1} parent=1 // loop_exit
      _
    %1144 = vsyncpa [#allocation6], 1
    %s1145 = scalar_lea.sflag [#allocation6], 1
    %1146 = vsyncpa %s1145, 1
    %1147 = vsyncpa [#allocation9], 1
    %1148 = vsyncpa [#allocation12], 1
    %1149 = vsyncpa [#allocation15], 1
    %1150 = vsyncpa [#allocation7], 1
    %s1151 = scalar_lea.sflag [#allocation7], 1
    %1152 = vsyncpa %s1151, 1

</llo_original>
